<compile_context>
chip_gen: v7x
topology: tpu7x:2x2x1
jax: 0.10.0
libtpu: 0.0.40
codegen_flags: <defaults>
</compile_context>

<pallas_src>
import jax
import jax.numpy as jnp
from jax.experimental import pallas as pl
from jax.experimental.pallas import tpu as pltpu


# ----------------------------- kernels ------------------------------------ #

def _kernel_split_conv2(vis_ref, ir_ref,
                        w1v_ref, w1i_ref, b1_ref,
                        w2v_ref, b2v_ref, w2i_ref, b2i_ref,
                        fused_ref, vis_e_ref, ir_e_ref):
    """Path for C % 8 != 0: conv2 done as two (C, C) matmuls."""
    vis = vis_ref[...]            # (C, TM)
    ir = ir_ref[...]              # (C, TM)

    # conv1 (1x1, 2C->C) == W1_vis @ vis + W1_ir @ ir + b1, then ReLU
    h = jnp.dot(w1v_ref[...], vis, preferred_element_type=jnp.float32)
    h = h + jnp.dot(w1i_ref[...], ir, preferred_element_type=jnp.float32)
    h = jnp.maximum(h + b1_ref[...], 0.0)

    # conv2 (1x1, C->2C), rows pre-split into vis / ir halves, then sigmoid
    att_vis = jax.nn.sigmoid(
        jnp.dot(w2v_ref[...], h, preferred_element_type=jnp.float32) + b2v_ref[...])
    att_ir = jax.nn.sigmoid(
        jnp.dot(w2i_ref[...], h, preferred_element_type=jnp.float32) + b2i_ref[...])

    vis_e = vis.astype(jnp.float32) * att_vis
    ir_e = ir.astype(jnp.float32) * att_ir
    fused_ref[...] = (vis_e + ir_e).astype(fused_ref.dtype)
    vis_e_ref[...] = vis_e.astype(vis_e_ref.dtype)
    ir_e_ref[...] = ir_e.astype(ir_e_ref.dtype)


def _kernel_fused_conv2(vis_ref, ir_ref,
                        w1v_ref, w1i_ref, b1_ref,
                        w2_ref, b2_ref,
                        fused_ref, vis_e_ref, ir_e_ref):
    """Path for C % 8 == 0: conv2 as a single (2C, C) matmul, split on sublanes."""
    vis = vis_ref[...]            # (C, TM)
    ir = ir_ref[...]              # (C, TM)
    C = vis.shape[0]

    h = jnp.dot(w1v_ref[...], vis, preferred_element_type=jnp.float32)
    h = h + jnp.dot(w1i_ref[...], ir, preferred_element_type=jnp.float32)
    h = jnp.maximum(h + b1_ref[...], 0.0)

    att = jax.nn.sigmoid(
        jnp.dot(w2_ref[...], h, preferred_element_type=jnp.float32) + b2_ref[...])
    att_vis = att[:C, :]          # clean sublane split (C multiple of 8)
    att_ir = att[C:, :]

    vis_e = vis.astype(jnp.float32) * att_vis
    ir_e = ir.astype(jnp.float32) * att_ir
    fused_ref[...] = (vis_e + ir_e).astype(fused_ref.dtype)
    vis_e_ref[...] = vis_e.astype(vis_e_ref.dtype)
    ir_e_ref[...] = ir_e.astype(ir_e_ref.dtype)


# ----------------------------- wrapper ------------------------------------ #

def _round_down_128(x):
    return max(128, (int(x) // 128) * 128)


def _choose_tile(hw, c, n, elem_bytes, tile_m, vmem_budget_bytes, target_step_bytes):
    """Spatial (lane) tile sized by HBM bytes/step, clamped by the VMEM budget."""
    # HBM bytes moved per lane column per grid step: 2 input + 3 output streams.
    per_col_hbm = 5 * c * elem_bytes
    # VMEM bytes per lane column: double-buffered streams + f32 intermediates.
    per_col_vmem = 10 * c * elem_bytes + 6 * c * 4
    want = _round_down_128(max(target_step_bytes // per_col_hbm, 128))
    cap = _round_down_128(max(vmem_budget_bytes // per_col_vmem, 128))
    tm = min(want, cap)
    if tile_m is not None:
        tm = min(tm, _round_down_128(tile_m))
    # Ensure >= 2 grid steps when batch == 1 so both v7x TensorCores get work.
    if n == 1:
        while tm > 128 and pl.cdiv(hw, tm) < 2:
            tm = _round_down_128(tm // 2)
    if hw <= tm:
        return hw                 # single full-extent tile (no 128 constraint)
    return tm


def _const_spec(shape, single_buffer):
    """BlockSpec for a grid-invariant (weight/bias) operand."""
    index_map = lambda n, i, _s=shape: (0,) * len(_s)
    if single_buffer:
        # Constant index_map: one buffer is enough; avoids redundant weight DMA
        # and halves the weight VMEM footprint.
        return pl.BlockSpec(shape, index_map, pipeline_mode=pl.Buffered(1))
    return pl.BlockSpec(shape, index_map)


def reinforced_fusion(vis_feat, ir_feat, params, *, tile_m=None,
                      vmem_budget_bytes=None, target_step_bytes=2 << 20):
    """vis_feat, ir_feat: (N, C, H, W) float32/bfloat16.  Returns (fused, vis_e, ir_e)."""
    assert vis_feat.shape == ir_feat.shape
    N, C, H, W = vis_feat.shape
    HW = H * W
    dtype = vis_feat.dtype
    eb = jnp.dtype(dtype).itemsize

    # Generation-aware VMEM sizing (v5e/v6e: 128 MiB, v7x: 64 MiB per core).
    try:
        vmem_capacity = int(pltpu.get_tpu_info().vmem_capacity_bytes)
    except Exception:
        vmem_capacity = 128 << 20
    if vmem_budget_bytes is None:
        # Data-stream budget ~3/8 of physical: 48 MiB on v5e/v6e, 24 MiB on v7x.
        vmem_budget_bytes = min(vmem_capacity * 3 // 8, 64 << 20)

    # Free, contiguous reshape: NCHW -> (N, C, H*W).  No transpose, no padding.
    vis3 = vis_feat.reshape(N, C, HW)
    ir3 = ir_feat.reshape(N, C, HW)

    tm = _choose_tile(HW, C, N, eb, tile_m, vmem_budget_bytes, target_step_bytes)
    n_tiles = pl.cdiv(HW, tm)     # ragged last tile handled by Pallas masking

    # Weights in the compute/IO dtype (bf16 path halves weight traffic too);
    # biases stay f32 (they add into the f32 accumulators).
    w1 = params["w1"].astype(dtype)
    w2 = params["w2"].astype(dtype)
    b1 = params["b1"].astype(jnp.float32)
    b2 = params["b2"].astype(jnp.float32)
    w1v, w1i = w1[:, :C], w1[:, C:]      # (C, 2C) split over vis / ir input channels
    b1c = b1.reshape(C, 1)

    data_spec = pl.BlockSpec((pl.Squeezed(), C, tm), lambda n, i: (n, 0, i))
    out_sds = jax.ShapeDtypeStruct((N, C, HW), dtype)

    if C % 8 == 0:
        kernel = _kernel_fused_conv2
        w_args = (w1v, w1i, b1c, w2, b2.reshape(2 * C, 1))
        w_shapes = [(C, C), (C, C), (C, 1), (2 * C, C), (2 * C, 1)]
    else:
        kernel = _kernel_split_conv2
        w_args = (w1v, w1i, b1c,
                  w2[:C, :], b2[:C].reshape(C, 1),
                  w2[C:, :], b2[C:].reshape(C, 1))
        w_shapes = [(C, C), (C, C), (C, 1), (C, C), (C, 1), (C, C), (C, 1)]

    # VMEM limit tied to the actual footprint + margin, capped at ~0.55 of
    # physical VMEM (keeps headroom for compiler scratch on v7x's 64 MiB).
    per_col_vmem = 10 * C * eb + 6 * C * 4
    weight_bytes = 2 * (4 * C * C * eb + 4 * C * 4)
    vmem_limit = int(min(max(per_col_vmem * tm + weight_bytes + (2 << 20), 16 << 20),
                         vmem_capacity * 11 // 20))

    def call(single_buffer_weights):
        w_specs = [_const_spec(s, single_buffer_weights) for s in w_shapes]
        return pl.pallas_call(
            kernel,
            out_shape=(out_sds, out_sds, out_sds),
            grid_spec=pltpu.PrefetchScalarGridSpec(
                num_scalar_prefetch=0,
                grid=(N, n_tiles),
                in_specs=[data_spec, data_spec] + w_specs,
                out_specs=[data_spec, data_spec, data_spec],
            ),
            compiler_params=pltpu.CompilerParams(
                dimension_semantics=("parallel", "parallel"),
                vmem_limit_bytes=vmem_limit),
        )(vis3, ir3, *w_args)

    try:
        fused3, vis_e3, ir_e3 = call(True)    # single-buffered constant weights
    except Exception:
        fused3, vis_e3, ir_e3 = call(False)   # fallback: default double-buffering

    def to4(x):
        return x.reshape(N, C, H, W)

    return to4(fused3), to4(vis_e3), to4(ir_e3)


# ------------------------- params / reference ------------------------------ #

def init_params(key, in_channels):
    """Deterministic synthetic init matching Conv2d(2C->C,1x1) and Conv2d(C->2C,1x1)."""
    C = in_channels
    k1, k2, k3, k4 = jax.random.split(key, 4)
    # 1x1 conv weights collapsed to plain matrices (out_ch, in_ch)
    w1 = jax.random.normal(k1, (C, 2 * C), jnp.float32) * 0.2
    b1 = jax.random.normal(k2, (C,), jnp.float32) * 0.05
    w2 = jax.random.normal(k3, (2 * C, C), jnp.float32) * 0.2
    b2 = jax.random.normal(k4, (2 * C,), jnp.float32) * 0.05
    return {"w1": w1, "b1": b1, "w2": w2, "b2": b2}


def _reference(vis, ir, params):
    """Plain-JAX reference reproducing the PyTorch forward (NCHW, f32)."""
    C = vis.shape[1]
    comb = jnp.concatenate([vis, ir], axis=1)                       # (N, 2C, H, W)
    h = jnp.einsum("oc,nchw->nohw", params["w1"], comb) + params["b1"][None, :, None, None]
    h = jnp.maximum(h, 0.0)
    att = jnp.einsum("oc,nchw->nohw", params["w2"], h) + params["b2"][None, :, None, None]
    att = jax.nn.sigmoid(att)
    vis_w, ir_w = att[:, :C], att[:, C:]
    vis_e = vis * vis_w
    ir_e = ir * ir_w
    return vis_e + ir_e, vis_e, ir_e


# ------------------------------- main -------------------------------------- #

if __name__ == "__main__":
    def run_case(N, C, H, W, case_key, *, dtype=jnp.float32, atol=1e-4, rtol=1e-4, **kw):
        kp, kv, ki = jax.random.split(case_key, 3)
        params = init_params(kp, C)
        vis = jax.random.normal(kv, (N, C, H, W), jnp.float32)
        ir = jax.random.normal(ki, (N, C, H, W), jnp.float32)
        if dtype != jnp.float32:
            vis = vis.astype(dtype)
            ir = ir.astype(dtype)
            params = {k: (v.astype(dtype) if k in ("w1", "w2") else v)
                      for k, v in params.items()}
        outs = reinforced_fusion(vis, ir, params, **kw)
        jax.block_until_ready(outs)
        ref_params = {k: v.astype(jnp.float32) for k, v in params.items()}
        refs = _reference(vis.astype(jnp.float32), ir.astype(jnp.float32), ref_params)
        for o, r in zip(outs, refs):
            of = o.astype(jnp.float32)
            assert jnp.allclose(of, r, atol=atol, rtol=rtol), (
                "max abs diff", float(jnp.max(jnp.abs(of - r))))

    key = jax.random.PRNGKey(0)
    k1, k2, k3, k4, k5 = jax.random.split(key, 5)

    # Small-C path (split-conv2 kernel), single full-extent spatial tile.
    run_case(2, 4, 16, 16, k1)
    # C % 8 == 0 path (single (2C, C) conv2 matmul, sublane split).
    run_case(2, 8, 16, 16, k2)
    # Multi-tile spatial grid (exercises 2-D grid index maps / pipelining).
    run_case(2, 4, 16, 16, k3, tile_m=128)
    # Ragged H*W (no host-side pad/slice; masked last tile).
    run_case(2, 8, 15, 15, k4, tile_m=128)
    # bf16 I/O path (halves HBM traffic); relaxed tolerance for bf16 stores.
    run_case(2, 8, 16, 16, k5, dtype=jnp.bfloat16, atol=3e-2, rtol=3e-2)

    print("KERNEL_OK")
</pallas_src>

<mosaic_0001>
module attributes {stable_mosaic.version = 11 : i64} {
  func.func @_kernel_split_conv2(%arg0: i32, %arg1: i32, %arg2: memref<1x4x256xf32, #tpu.memory_space<vmem>>, %arg3: memref<1x4x256xf32, #tpu.memory_space<vmem>>, %arg4: memref<4x4xf32, #tpu.memory_space<vmem>>, %arg5: memref<4x4xf32, #tpu.memory_space<vmem>>, %arg6: memref<4x1xf32, #tpu.memory_space<vmem>>, %arg7: memref<4x4xf32, #tpu.memory_space<vmem>>, %arg8: memref<4x1xf32, #tpu.memory_space<vmem>>, %arg9: memref<4x4xf32, #tpu.memory_space<vmem>>, %arg10: memref<4x1xf32, #tpu.memory_space<vmem>>, %arg11: memref<1x4x256xf32, #tpu.memory_space<vmem>>, %arg12: memref<1x4x256xf32, #tpu.memory_space<vmem>>, %arg13: memref<1x4x256xf32, #tpu.memory_space<vmem>>) attributes {dimension_semantics = [#tpu.dimension_semantics<parallel>, #tpu.dimension_semantics<parallel>], iteration_bounds = array<i64: 2, 1>, scalar_prefetch = 0 : i64, scratch_operands = 0 : i64, tpu.core_type = #tpu.core_type<tc>, window_params = [{transform_indices = @transform_0, window_bounds = array<i64: 1, 4, 256>}, {transform_indices = @transform_1, window_bounds = array<i64: 1, 4, 256>}, {pipeline_mode = #tpu.pipeline_mode<synchronous>, transform_indices = @transform_2, window_bounds = array<i64: 4, 4>}, {pipeline_mode = #tpu.pipeline_mode<synchronous>, transform_indices = @transform_3, window_bounds = array<i64: 4, 4>}, {pipeline_mode = #tpu.pipeline_mode<synchronous>, transform_indices = @transform_4, window_bounds = array<i64: 4, 1>}, {pipeline_mode = #tpu.pipeline_mode<synchronous>, transform_indices = @transform_5, window_bounds = array<i64: 4, 4>}, {pipeline_mode = #tpu.pipeline_mode<synchronous>, transform_indices = @transform_6, window_bounds = array<i64: 4, 1>}, {pipeline_mode = #tpu.pipeline_mode<synchronous>, transform_indices = @transform_7, window_bounds = array<i64: 4, 4>}, {pipeline_mode = #tpu.pipeline_mode<synchronous>, transform_indices = @transform_8, window_bounds = array<i64: 4, 1>}, {transform_indices = @transform_9, window_bounds = array<i64: 1, 4, 256>}, {transform_indices = @transform_10, window_bounds = array<i64: 1, 4, 256>}, {transform_indices = @transform_11, window_bounds = array<i64: 1, 4, 256>}]} {
    %c0 = arith.constant 0 : index
    %c0_0 = arith.constant 0 : index
    %c0_1 = arith.constant 0 : index
    %0 = vector.load %arg2[%c0, %c0_0, %c0_1] : memref<1x4x256xf32, #tpu.memory_space<vmem>>, vector<1x4x256xf32>
    %1 = vector.shape_cast %0 : vector<1x4x256xf32> to vector<4x256xf32>
    %c0_2 = arith.constant 0 : index
    %c0_3 = arith.constant 0 : index
    %c0_4 = arith.constant 0 : index
    %2 = vector.load %arg3[%c0_2, %c0_3, %c0_4] : memref<1x4x256xf32, #tpu.memory_space<vmem>>, vector<1x4x256xf32>
    %3 = vector.shape_cast %2 : vector<1x4x256xf32> to vector<4x256xf32>
    %c0_5 = arith.constant 0 : index
    %c0_6 = arith.constant 0 : index
    %4 = vector.load %arg4[%c0_5, %c0_6] : memref<4x4xf32, #tpu.memory_space<vmem>>, vector<4x4xf32>
    %cst = arith.constant dense<0.000000e+00> : vector<4x256xf32>
    %5 = tpu.matmul %4, %1, %cst {dimension_numbers = #tpu.dot_dimension_numbers<[1], [0], [0], [1], [0, 0, 1, 1], [], []>} : vector<4x4xf32>, vector<4x256xf32>, vector<4x256xf32> -> vector<4x256xf32>
    %c0_7 = arith.constant 0 : index
    %c0_8 = arith.constant 0 : index
    %6 = vector.load %arg5[%c0_7, %c0_8] : memref<4x4xf32, #tpu.memory_space<vmem>>, vector<4x4xf32>
    %cst_9 = arith.constant dense<0.000000e+00> : vector<4x256xf32>
    %7 = tpu.matmul %6, %3, %cst_9 {dimension_numbers = #tpu.dot_dimension_numbers<[1], [0], [0], [1], [0, 0, 1, 1], [], []>} : vector<4x4xf32>, vector<4x256xf32>, vector<4x256xf32> -> vector<4x256xf32>
    %8 = arith.addf %5, %7 : vector<4x256xf32>
    %c0_10 = arith.constant 0 : index
    %c0_11 = arith.constant 0 : index
    %9 = vector.load %arg6[%c0_10, %c0_11] : memref<4x1xf32, #tpu.memory_space<vmem>>, vector<4x1xf32>
    %10 = vector.broadcast %9 : vector<4x1xf32> to vector<4x256xf32>
    %11 = arith.addf %8, %10 : vector<4x256xf32>
    %cst_12 = arith.constant 0.000000e+00 : f32
    %12 = vector.broadcast %cst_12 : f32 to vector<4x256xf32>
    %13 = arith.maximumf %11, %12 : vector<4x256xf32>
    %c0_13 = arith.constant 0 : index
    %c0_14 = arith.constant 0 : index
    %14 = vector.load %arg7[%c0_13, %c0_14] : memref<4x4xf32, #tpu.memory_space<vmem>>, vector<4x4xf32>
    %cst_15 = arith.constant dense<0.000000e+00> : vector<4x256xf32>
    %15 = tpu.matmul %14, %13, %cst_15 {dimension_numbers = #tpu.dot_dimension_numbers<[1], [0], [0], [1], [0, 0, 1, 1], [], []>} : vector<4x4xf32>, vector<4x256xf32>, vector<4x256xf32> -> vector<4x256xf32>
    %c0_16 = arith.constant 0 : index
    %c0_17 = arith.constant 0 : index
    %16 = vector.load %arg8[%c0_16, %c0_17] : memref<4x1xf32, #tpu.memory_space<vmem>>, vector<4x1xf32>
    %17 = vector.broadcast %16 : vector<4x1xf32> to vector<4x256xf32>
    %18 = arith.addf %15, %17 : vector<4x256xf32>
    %19 = arith.negf %18 : vector<4x256xf32>
    %20 = math.exp %19 : vector<4x256xf32>
    %cst_18 = arith.constant 1.000000e+00 : f32
    %21 = vector.broadcast %cst_18 : f32 to vector<4x256xf32>
    %22 = arith.addf %21, %20 : vector<4x256xf32>
    %23 = arith.divf %21, %22 : vector<4x256xf32>
    %c0_19 = arith.constant 0 : index
    %c0_20 = arith.constant 0 : index
    %24 = vector.load %arg9[%c0_19, %c0_20] : memref<4x4xf32, #tpu.memory_space<vmem>>, vector<4x4xf32>
    %cst_21 = arith.constant dense<0.000000e+00> : vector<4x256xf32>
    %25 = tpu.matmul %24, %13, %cst_21 {dimension_numbers = #tpu.dot_dimension_numbers<[1], [0], [0], [1], [0, 0, 1, 1], [], []>} : vector<4x4xf32>, vector<4x256xf32>, vector<4x256xf32> -> vector<4x256xf32>
    %c0_22 = arith.constant 0 : index
    %c0_23 = arith.constant 0 : index
    %26 = vector.load %arg10[%c0_22, %c0_23] : memref<4x1xf32, #tpu.memory_space<vmem>>, vector<4x1xf32>
    %27 = vector.broadcast %26 : vector<4x1xf32> to vector<4x256xf32>
    %28 = arith.addf %25, %27 : vector<4x256xf32>
    %29 = arith.negf %28 : vector<4x256xf32>
    %30 = math.exp %29 : vector<4x256xf32>
    %cst_24 = arith.constant 1.000000e+00 : f32
    %31 = vector.broadcast %cst_24 : f32 to vector<4x256xf32>
    %32 = arith.addf %31, %30 : vector<4x256xf32>
    %33 = arith.divf %31, %32 : vector<4x256xf32>
    %34 = arith.mulf %1, %23 : vector<4x256xf32>
    %35 = arith.mulf %3, %33 : vector<4x256xf32>
    %36 = arith.addf %34, %35 : vector<4x256xf32>
    %c0_25 = arith.constant 0 : index
    %c0_26 = arith.constant 0 : index
    %c0_27 = arith.constant 0 : index
    %37 = vector.load %arg11[%c0_25, %c0_26, %c0_27] : memref<1x4x256xf32, #tpu.memory_space<vmem>>, vector<1x4x256xf32>
    %38 = vector.shape_cast %37 : vector<1x4x256xf32> to vector<4x256xf32>
    %39 = vector.shape_cast %36 : vector<4x256xf32> to vector<1x4x256xf32>
    tpu.vector_store %arg11[%c0_25, %c0_26, %c0_27], %39 {strides = array<i32>} : memref<1x4x256xf32, #tpu.memory_space<vmem>>, vector<1x4x256xf32>,
    %c0_28 = arith.constant 0 : index
    %c0_29 = arith.constant 0 : index
    %c0_30 = arith.constant 0 : index
    %40 = vector.load %arg12[%c0_28, %c0_29, %c0_30] : memref<1x4x256xf32, #tpu.memory_space<vmem>>, vector<1x4x256xf32>
    %41 = vector.shape_cast %40 : vector<1x4x256xf32> to vector<4x256xf32>
    %42 = vector.shape_cast %34 : vector<4x256xf32> to vector<1x4x256xf32>
    tpu.vector_store %arg12[%c0_28, %c0_29, %c0_30], %42 {strides = array<i32>} : memref<1x4x256xf32, #tpu.memory_space<vmem>>, vector<1x4x256xf32>,
    %c0_31 = arith.constant 0 : index
    %c0_32 = arith.constant 0 : index
    %c0_33 = arith.constant 0 : index
    %43 = vector.load %arg13[%c0_31, %c0_32, %c0_33] : memref<1x4x256xf32, #tpu.memory_space<vmem>>, vector<1x4x256xf32>
    %44 = vector.shape_cast %43 : vector<1x4x256xf32> to vector<4x256xf32>
    %45 = vector.shape_cast %35 : vector<4x256xf32> to vector<1x4x256xf32>
    tpu.vector_store %arg13[%c0_31, %c0_32, %c0_33], %45 {strides = array<i32>} : memref<1x4x256xf32, #tpu.memory_space<vmem>>, vector<1x4x256xf32>,
    return
  }
  func.func @transform_0(%arg0: i32, %arg1: i32) -> (i32, i32, i32) {
    %c0_i32 = arith.constant 0 : i32
    %c0_i32_0 = arith.constant 0 : i32
    return %arg0, %c0_i32, %arg1 : i32, i32, i32
  }
  func.func @transform_1(%arg0: i32, %arg1: i32) -> (i32, i32, i32) {
    %c0_i32 = arith.constant 0 : i32
    %c0_i32_0 = arith.constant 0 : i32
    return %arg0, %c0_i32, %arg1 : i32, i32, i32
  }
  func.func @transform_2(%arg0: i32, %arg1: i32) -> (i32, i32) {
    %c0_i32 = arith.constant 0 : i32
    %c0_i32_0 = arith.constant 0 : i32
    %c0_i32_1 = arith.constant 0 : i32
    return %c0_i32, %c0_i32_0 : i32, i32
  }
  func.func @transform_3(%arg0: i32, %arg1: i32) -> (i32, i32) {
    %c0_i32 = arith.constant 0 : i32
    %c0_i32_0 = arith.constant 0 : i32
    %c0_i32_1 = arith.constant 0 : i32
    return %c0_i32, %c0_i32_0 : i32, i32
  }
  func.func @transform_4(%arg0: i32, %arg1: i32) -> (i32, i32) {
    %c0_i32 = arith.constant 0 : i32
    %c0_i32_0 = arith.constant 0 : i32
    %c0_i32_1 = arith.constant 0 : i32
    return %c0_i32, %c0_i32_0 : i32, i32
  }
  func.func @transform_5(%arg0: i32, %arg1: i32) -> (i32, i32) {
    %c0_i32 = arith.constant 0 : i32
    %c0_i32_0 = arith.constant 0 : i32
    %c0_i32_1 = arith.constant 0 : i32
    return %c0_i32, %c0_i32_0 : i32, i32
  }
  func.func @transform_6(%arg0: i32, %arg1: i32) -> (i32, i32) {
    %c0_i32 = arith.constant 0 : i32
    %c0_i32_0 = arith.constant 0 : i32
    %c0_i32_1 = arith.constant 0 : i32
    return %c0_i32, %c0_i32_0 : i32, i32
  }
  func.func @transform_7(%arg0: i32, %arg1: i32) -> (i32, i32) {
    %c0_i32 = arith.constant 0 : i32
    %c0_i32_0 = arith.constant 0 : i32
    %c0_i32_1 = arith.constant 0 : i32
    return %c0_i32, %c0_i32_0 : i32, i32
  }
  func.func @transform_8(%arg0: i32, %arg1: i32) -> (i32, i32) {
    %c0_i32 = arith.constant 0 : i32
    %c0_i32_0 = arith.constant 0 : i32
    %c0_i32_1 = arith.constant 0 : i32
    return %c0_i32, %c0_i32_0 : i32, i32
  }
  func.func @transform_9(%arg0: i32, %arg1: i32) -> (i32, i32, i32) {
    %c0_i32 = arith.constant 0 : i32
    %c0_i32_0 = arith.constant 0 : i32
    return %arg0, %c0_i32, %arg1 : i32, i32, i32
  }
  func.func @transform_10(%arg0: i32, %arg1: i32) -> (i32, i32, i32) {
    %c0_i32 = arith.constant 0 : i32
    %c0_i32_0 = arith.constant 0 : i32
    return %arg0, %c0_i32, %arg1 : i32, i32, i32
  }
  func.func @transform_11(%arg0: i32, %arg1: i32) -> (i32, i32, i32) {
    %c0_i32 = arith.constant 0 : i32
    %c0_i32_0 = arith.constant 0 : i32
    return %arg0, %c0_i32, %arg1 : i32, i32, i32
  }
}

module attributes {stable_mosaic.version = 11 : i64} {
  func.func @_kernel_split_conv2(%arg0: i32, %arg1: i32, %arg2: memref<1x4x256xf32, #tpu.memory_space<vmem>>, %arg3: memref<1x4x256xf32, #tpu.memory_space<vmem>>, %arg4: memref<4x4xf32, #tpu.memory_space<vmem>>, %arg5: memref<4x4xf32, #tpu.memory_space<vmem>>, %arg6: memref<4x1xf32, #tpu.memory_space<vmem>>, %arg7: memref<4x4xf32, #tpu.memory_space<vmem>>, %arg8: memref<4x1xf32, #tpu.memory_space<vmem>>, %arg9: memref<4x4xf32, #tpu.memory_space<vmem>>, %arg10: memref<4x1xf32, #tpu.memory_space<vmem>>, %arg11: memref<1x4x256xf32, #tpu.memory_space<vmem>>, %arg12: memref<1x4x256xf32, #tpu.memory_space<vmem>>, %arg13: memref<1x4x256xf32, #tpu.memory_space<vmem>>) attributes {dimension_semantics = [#tpu.dimension_semantics<parallel>, #tpu.dimension_semantics<parallel>], iteration_bounds = array<i64: 2, 1>, scalar_prefetch = 0 : i64, scratch_operands = 0 : i64, tpu.core_type = #tpu.core_type<tc>, window_params = [{transform_indices = @transform_0, window_bounds = array<i64: 1, 4, 256>}, {transform_indices = @transform_1, window_bounds = array<i64: 1, 4, 256>}, {pipeline_mode = #tpu.pipeline_mode<synchronous>, transform_indices = @transform_2, window_bounds = array<i64: 4, 4>}, {pipeline_mode = #tpu.pipeline_mode<synchronous>, transform_indices = @transform_3, window_bounds = array<i64: 4, 4>}, {pipeline_mode = #tpu.pipeline_mode<synchronous>, transform_indices = @transform_4, window_bounds = array<i64: 4, 1>}, {pipeline_mode = #tpu.pipeline_mode<synchronous>, transform_indices = @transform_5, window_bounds = array<i64: 4, 4>}, {pipeline_mode = #tpu.pipeline_mode<synchronous>, transform_indices = @transform_6, window_bounds = array<i64: 4, 1>}, {pipeline_mode = #tpu.pipeline_mode<synchronous>, transform_indices = @transform_7, window_bounds = array<i64: 4, 4>}, {pipeline_mode = #tpu.pipeline_mode<synchronous>, transform_indices = @transform_8, window_bounds = array<i64: 4, 1>}, {transform_indices = @transform_9, window_bounds = array<i64: 1, 4, 256>}, {transform_indices = @transform_10, window_bounds = array<i64: 1, 4, 256>}, {transform_indices = @transform_11, window_bounds = array<i64: 1, 4, 256>}]} {
    %c0 = arith.constant 0 : index
    %c0_0 = arith.constant 0 : index
    %c0_1 = arith.constant 0 : index
    %0 = vector.load %arg2[%c0, %c0_0, %c0_1] : memref<1x4x256xf32, #tpu.memory_space<vmem>>, vector<1x4x256xf32>
    %1 = vector.shape_cast %0 : vector<1x4x256xf32> to vector<4x256xf32>
    %c0_2 = arith.constant 0 : index
    %c0_3 = arith.constant 0 : index
    %c0_4 = arith.constant 0 : index
    %2 = vector.load %arg3[%c0_2, %c0_3, %c0_4] : memref<1x4x256xf32, #tpu.memory_space<vmem>>, vector<1x4x256xf32>
    %3 = vector.shape_cast %2 : vector<1x4x256xf32> to vector<4x256xf32>
    %c0_5 = arith.constant 0 : index
    %c0_6 = arith.constant 0 : index
    %4 = vector.load %arg4[%c0_5, %c0_6] : memref<4x4xf32, #tpu.memory_space<vmem>>, vector<4x4xf32>
    %cst = arith.constant dense<0.000000e+00> : vector<4x256xf32>
    %5 = tpu.matmul %4, %1, %cst {dimension_numbers = #tpu.dot_dimension_numbers<[1], [0], [0], [1], [0, 0, 1, 1], [], []>} : vector<4x4xf32>, vector<4x256xf32>, vector<4x256xf32> -> vector<4x256xf32>
    %c0_7 = arith.constant 0 : index
    %c0_8 = arith.constant 0 : index
    %6 = vector.load %arg5[%c0_7, %c0_8] : memref<4x4xf32, #tpu.memory_space<vmem>>, vector<4x4xf32>
    %cst_9 = arith.constant dense<0.000000e+00> : vector<4x256xf32>
    %7 = tpu.matmul %6, %3, %cst_9 {dimension_numbers = #tpu.dot_dimension_numbers<[1], [0], [0], [1], [0, 0, 1, 1], [], []>} : vector<4x4xf32>, vector<4x256xf32>, vector<4x256xf32> -> vector<4x256xf32>
    %8 = arith.addf %5, %7 : vector<4x256xf32>
    %c0_10 = arith.constant 0 : index
    %c0_11 = arith.constant 0 : index
    %9 = vector.load %arg6[%c0_10, %c0_11] : memref<4x1xf32, #tpu.memory_space<vmem>>, vector<4x1xf32>
    %10 = vector.broadcast %9 : vector<4x1xf32> to vector<4x256xf32>
    %11 = arith.addf %8, %10 : vector<4x256xf32>
    %cst_12 = arith.constant 0.000000e+00 : f32
    %12 = vector.broadcast %cst_12 : f32 to vector<4x256xf32>
    %13 = arith.maximumf %11, %12 : vector<4x256xf32>
    %c0_13 = arith.constant 0 : index
    %c0_14 = arith.constant 0 : index
    %14 = vector.load %arg7[%c0_13, %c0_14] : memref<4x4xf32, #tpu.memory_space<vmem>>, vector<4x4xf32>
    %cst_15 = arith.constant dense<0.000000e+00> : vector<4x256xf32>
    %15 = tpu.matmul %14, %13, %cst_15 {dimension_numbers = #tpu.dot_dimension_numbers<[1], [0], [0], [1], [0, 0, 1, 1], [], []>} : vector<4x4xf32>, vector<4x256xf32>, vector<4x256xf32> -> vector<4x256xf32>
    %c0_16 = arith.constant 0 : index
    %c0_17 = arith.constant 0 : index
    %16 = vector.load %arg8[%c0_16, %c0_17] : memref<4x1xf32, #tpu.memory_space<vmem>>, vector<4x1xf32>
    %17 = vector.broadcast %16 : vector<4x1xf32> to vector<4x256xf32>
    %18 = arith.addf %15, %17 : vector<4x256xf32>
    %19 = arith.negf %18 : vector<4x256xf32>
    %20 = math.exp %19 : vector<4x256xf32>
    %cst_18 = arith.constant 1.000000e+00 : f32
    %21 = vector.broadcast %cst_18 : f32 to vector<4x256xf32>
    %22 = arith.addf %21, %20 : vector<4x256xf32>
    %23 = arith.divf %21, %22 : vector<4x256xf32>
    %c0_19 = arith.constant 0 : index
    %c0_20 = arith.constant 0 : index
    %24 = vector.load %arg9[%c0_19, %c0_20] : memref<4x4xf32, #tpu.memory_space<vmem>>, vector<4x4xf32>
    %cst_21 = arith.constant dense<0.000000e+00> : vector<4x256xf32>
    %25 = tpu.matmul %24, %13, %cst_21 {dimension_numbers = #tpu.dot_dimension_numbers<[1], [0], [0], [1], [0, 0, 1, 1], [], []>} : vector<4x4xf32>, vector<4x256xf32>, vector<4x256xf32> -> vector<4x256xf32>
    %c0_22 = arith.constant 0 : index
    %c0_23 = arith.constant 0 : index
    %26 = vector.load %arg10[%c0_22, %c0_23] : memref<4x1xf32, #tpu.memory_space<vmem>>, vector<4x1xf32>
    %27 = vector.broadcast %26 : vector<4x1xf32> to vector<4x256xf32>
    %28 = arith.addf %25, %27 : vector<4x256xf32>
    %29 = arith.negf %28 : vector<4x256xf32>
    %30 = math.exp %29 : vector<4x256xf32>
    %cst_24 = arith.constant 1.000000e+00 : f32
    %31 = vector.broadcast %cst_24 : f32 to vector<4x256xf32>
    %32 = arith.addf %31, %30 : vector<4x256xf32>
    %33 = arith.divf %31, %32 : vector<4x256xf32>
    %34 = arith.mulf %1, %23 : vector<4x256xf32>
    %35 = arith.mulf %3, %33 : vector<4x256xf32>
    %36 = arith.addf %34, %35 : vector<4x256xf32>
    %c0_25 = arith.constant 0 : index
    %c0_26 = arith.constant 0 : index
    %c0_27 = arith.constant 0 : index
    %37 = vector.load %arg11[%c0_25, %c0_26, %c0_27] : memref<1x4x256xf32, #tpu.memory_space<vmem>>, vector<1x4x256xf32>
    %38 = vector.shape_cast %37 : vector<1x4x256xf32> to vector<4x256xf32>
    %39 = vector.shape_cast %36 : vector<4x256xf32> to vector<1x4x256xf32>
    tpu.vector_store %arg11[%c0_25, %c0_26, %c0_27], %39 {strides = array<i32>} : memref<1x4x256xf32, #tpu.memory_space<vmem>>, vector<1x4x256xf32>,
    %c0_28 = arith.constant 0 : index
    %c0_29 = arith.constant 0 : index
    %c0_30 = arith.constant 0 : index
    %40 = vector.load %arg12[%c0_28, %c0_29, %c0_30] : memref<1x4x256xf32, #tpu.memory_space<vmem>>, vector<1x4x256xf32>
    %41 = vector.shape_cast %40 : vector<1x4x256xf32> to vector<4x256xf32>
    %42 = vector.shape_cast %34 : vector<4x256xf32> to vector<1x4x256xf32>
    tpu.vector_store %arg12[%c0_28, %c0_29, %c0_30], %42 {strides = array<i32>} : memref<1x4x256xf32, #tpu.memory_space<vmem>>, vector<1x4x256xf32>,
    %c0_31 = arith.constant 0 : index
    %c0_32 = arith.constant 0 : index
    %c0_33 = arith.constant 0 : index
    %43 = vector.load %arg13[%c0_31, %c0_32, %c0_33] : memref<1x4x256xf32, #tpu.memory_space<vmem>>, vector<1x4x256xf32>
    %44 = vector.shape_cast %43 : vector<1x4x256xf32> to vector<4x256xf32>
    %45 = vector.shape_cast %35 : vector<4x256xf32> to vector<1x4x256xf32>
    tpu.vector_store %arg13[%c0_31, %c0_32, %c0_33], %45 {strides = array<i32>} : memref<1x4x256xf32, #tpu.memory_space<vmem>>, vector<1x4x256xf32>,
    return
  }
  func.func @transform_0(%arg0: i32, %arg1: i32) -> (i32, i32, i32) {
    %c0_i32 = arith.constant 0 : i32
    %c0_i32_0 = arith.constant 0 : i32
    return %arg0, %c0_i32, %arg1 : i32, i32, i32
  }
  func.func @transform_1(%arg0: i32, %arg1: i32) -> (i32, i32, i32) {
    %c0_i32 = arith.constant 0 : i32
    %c0_i32_0 = arith.constant 0 : i32
    return %arg0, %c0_i32, %arg1 : i32, i32, i32
  }
  func.func @transform_2(%arg0: i32, %arg1: i32) -> (i32, i32) {
    %c0_i32 = arith.constant 0 : i32
    %c0_i32_0 = arith.constant 0 : i32
    %c0_i32_1 = arith.constant 0 : i32
    return %c0_i32, %c0_i32_0 : i32, i32
  }
  func.func @transform_3(%arg0: i32, %arg1: i32) -> (i32, i32) {
    %c0_i32 = arith.constant 0 : i32
    %c0_i32_0 = arith.constant 0 : i32
    %c0_i32_1 = arith.constant 0 : i32
    return %c0_i32, %c0_i32_0 : i32, i32
  }
  func.func @transform_4(%arg0: i32, %arg1: i32) -> (i32, i32) {
    %c0_i32 = arith.constant 0 : i32
    %c0_i32_0 = arith.constant 0 : i32
    %c0_i32_1 = arith.constant 0 : i32
    return %c0_i32, %c0_i32_0 : i32, i32
  }
  func.func @transform_5(%arg0: i32, %arg1: i32) -> (i32, i32) {
    %c0_i32 = arith.constant 0 : i32
    %c0_i32_0 = arith.constant 0 : i32
    %c0_i32_1 = arith.constant 0 : i32
    return %c0_i32, %c0_i32_0 : i32, i32
  }
  func.func @transform_6(%arg0: i32, %arg1: i32) -> (i32, i32) {
    %c0_i32 = arith.constant 0 : i32
    %c0_i32_0 = arith.constant 0 : i32
    %c0_i32_1 = arith.constant 0 : i32
    return %c0_i32, %c0_i32_0 : i32, i32
  }
  func.func @transform_7(%arg0: i32, %arg1: i32) -> (i32, i32) {
    %c0_i32 = arith.constant 0 : i32
    %c0_i32_0 = arith.constant 0 : i32
    %c0_i32_1 = arith.constant 0 : i32
    return %c0_i32, %c0_i32_0 : i32, i32
  }
  func.func @transform_8(%arg0: i32, %arg1: i32) -> (i32, i32) {
    %c0_i32 = arith.constant 0 : i32
    %c0_i32_0 = arith.constant 0 : i32
    %c0_i32_1 = arith.constant 0 : i32
    return %c0_i32, %c0_i32_0 : i32, i32
  }
  func.func @transform_9(%arg0: i32, %arg1: i32) -> (i32, i32, i32) {
    %c0_i32 = arith.constant 0 : i32
    %c0_i32_0 = arith.constant 0 : i32
    return %arg0, %c0_i32, %arg1 : i32, i32, i32
  }
  func.func @transform_10(%arg0: i32, %arg1: i32) -> (i32, i32, i32) {
    %c0_i32 = arith.constant 0 : i32
    %c0_i32_0 = arith.constant 0 : i32
    return %arg0, %c0_i32, %arg1 : i32, i32, i32
  }
  func.func @transform_11(%arg0: i32, %arg1: i32) -> (i32, i32, i32) {
    %c0_i32 = arith.constant 0 : i32
    %c0_i32_0 = arith.constant 0 : i32
    return %arg0, %c0_i32, %arg1 : i32, i32, i32
  }
}

</mosaic_0001>

<llo_original>
// kernel: tpu_custom_call.1
$region0: #{tpu_custom_call.1}
  #allocation0 [shape = 'u32[]', space=smem, size = 0x4, offset = 0x4, fixed_abs, tag = 'smem constant byte address 0x4 - core index']
  #allocation1 [shape = 'u32[144,128]{1,0:T(1,128)}', space=vmem, size = 0x12000, scoped, tag = 'internal scratch']
  %s0 = inlined_call_operand.hbm [shape: f32[2,4,256], index: 0, kind: input, shape index: {}]
  %s1 = inlined_call_operand.vmem [shape: f32[2,4,256], index: 1, kind: input, shape index: {}]
  %s2 = inlined_call_operand.vmem [shape: f32[4,4], index: 2, kind: input, shape index: {}]
  %s3 = inlined_call_operand.vmem [shape: f32[4,4], index: 3, kind: input, shape index: {}]
  %s4 = inlined_call_operand.vmem [shape: f32[4,1], index: 4, kind: input, shape index: {}]
  %s5 = inlined_call_operand.vmem [shape: f32[4,4], index: 5, kind: input, shape index: {}]
  %s6 = inlined_call_operand.vmem [shape: f32[4,1], index: 6, kind: input, shape index: {}]
  %s7 = inlined_call_operand.vmem [shape: f32[4,4], index: 7, kind: input, shape index: {}]
  %s8 = inlined_call_operand.vmem [shape: f32[4,1], index: 8, kind: input, shape index: {}]
  %s9 = inlined_call_operand.hbm [shape: f32[2,4,256], index: 9, kind: output, shape index: {0}]
  %s10 = inlined_call_operand.hbm [shape: f32[2,4,256], index: 10, kind: output, shape index: {1}]
  %s11 = inlined_call_operand.hbm [shape: f32[2,4,256], index: 11, kind: output, shape index: {2}]
  %12 = xla_tuple %s9, %s10, %s11
  %s13 = sld [smem:[#allocation0]]
  $region89: #{tpu_custom_call.1} parent=0
    _
  %s15 = ssub.s32 1, %s13
  %s16 = scalar_select 0, %s15, %s13
  $region1: #{tpu_custom_call.1} parent=0
    #allocation2 [shape = 'u8[8192]{0}', space=vmem, size = 0x2000, scoped, tag = 'input window, operand 0']
    #allocation3 [shape = 's32[2]{0}', space=sflag, size = 0x8, scoped, tag = 'scoped memory for tpu_custom_call.1']
    #allocation4 [shape = 's32[2]{0}', space=sflag, size = 0x8, scoped, tag = 'scoped memory for tpu_custom_call.1']
    #allocation5 [shape = 'u8[8192]{0}', space=vmem, size = 0x2000, scoped, tag = 'output window, operand 0']
    #allocation6 [shape = 'u8[8192]{0}', space=vmem, size = 0x2000, scoped, tag = 'output window, operand 1']
    #allocation7 [shape = 's32[2]{0}', space=sflag, size = 0x8, scoped, tag = 'scoped memory for tpu_custom_call.1']
    #allocation8 [shape = 'u8[8192]{0}', space=vmem, size = 0x2000, scoped, tag = 'output window, operand 2']
    %17 = vsyncpa [#allocation3], 0
    %s18 = scalar_lea.sflag [#allocation3], 1
    %19 = vsyncpa %s18, 0
    %20 = vsyncpa [#allocation4], 0
    %s21 = scalar_lea.sflag [#allocation4], 1
    %22 = vsyncpa %s21, 0
    %23 = vsyncpa [#allocation7], 0
    %s24 = scalar_lea.sflag [#allocation7], 1
    %25 = vsyncpa %s24, 0
    loop: start=0, step=1, limit=4
    $region2: #{tpu_custom_call.1} parent=1 // loop_pre_header
      _
    $region3: #{tpu_custom_call.1} parent=1 // loop_header
      %s27 = sphi 0, %s31
      %p28 = scmp.ge.s32.totalorder %s27, 4
      %s34 = sphi 0, %s46
      %s35 = sphi 0, %s42
      %s36 = sphi 0, %s34
      %s37 = sphi 0, %s35
      %s38 = sphi 0, %s36
      %s39 = sphi 0, %s37
      %s51 = sphi 0, %s53
      %s54 = sphi 0, %s51
      %s55 = sphi 0, %s54
      %s71 = sphi 0, %s55
      %s79 = sphi 0, %s81
      %s82 = sphi 0, %s79
      %s83 = sphi 0, %s82
      %s99 = sphi 0, %s83
      %s103 = sphi 0, %s103
      %s105 = sphi 0, %s103
      %s106 = sphi 0, %s105
      %s120 = sphi 0, %s106
      %s124 = sphi 0, %s124
      %s126 = sphi 0, %s124
      %s127 = sphi 0, %s126
      %s141 = sphi 0, %s127
      %s145 = sphi 0, %s145
      %s147 = sphi 0, %s145
      %s148 = sphi 0, %s147
      %s162 = sphi 0, %s148
      %s166 = sphi 0, %s166
      %s168 = sphi 0, %s166
      %s169 = sphi 0, %s168
      %s183 = sphi 0, %s169
      %s187 = sphi 0, %s187
      %s189 = sphi 0, %s187
      %s190 = sphi 0, %s189
      %s204 = sphi 0, %s190
      %s208 = sphi 0, %s208
      %s210 = sphi 0, %s208
      %s211 = sphi 0, %s210
      %s225 = sphi 0, %s211
      %s229 = sphi 0, %s229
      %s231 = sphi 0, %s229
      %s232 = sphi 0, %s231
      %s246 = sphi 0, %s232
      %s254 = sphi 0, %s256
      %s257 = sphi 0, %s254
      %s258 = sphi 0, %s257
      %s274 = sphi 0, %s258
      %s282 = sphi 0, %s284
      %s285 = sphi 0, %s282
      %s286 = sphi 0, %s285
      %s302 = sphi 0, %s286
      %s310 = sphi 0, %s312
      %s313 = sphi 0, %s310
      %s314 = sphi 0, %s313
      %s330 = sphi 0, %s314
    $region4: #{tpu_custom_call.1} parent=1 // loop_header_branch
      %30 = sbr.rel (%p28) target = $region8
    $region5: #{tpu_custom_call.1} parent=1 // loop_body
      %s32 = ssub.s32 %s27, 1
      %s33 = ssub.s32 %s27, 2
      %s40 = sadd.s32 1, %s35
      %p41 = scmp.ge.s32.totalorder %s40, 1
      %s42 = scalar_select %p41, 0, %s40
      %s43 = sadd.s32 1, %s34
      %s44 = scalar_select %p41, %s43, %s34
      %p45 = scmp.ge.s32.totalorder %s44, 2
      %s46 = scalar_select %p45, 0, %s44
      %s47 = ssub.s32 %s34, %s46
      %s48 = ssub.s32 %s35, %s42
      %s49 = sor.u32 %s47, %s48
      %p50 = scmp.eq.s32.totalorder %s49, 0
      %s52 = sadd.s32 %s51, 1
      %s53 = scalar_select %p50, %s51, %s52
      %p56 = pneg %p50
      %p57 = scmp.eq.s32.totalorder %s27, 1
      %p58 = por %p56, %p57
      %p59 = scmp.ne.s32.totalorder %s51, %s54
      %p60 = scmp.eq.s32.totalorder %s27, 0
      %p61 = por %p59, %p60
      %p62 = scmp.ne.s32.totalorder %s51, %s54
      %p63 = scmp.eq.s32.totalorder %s32, 1
      %p64 = por %p62, %p63
      %p65 = scmp.ne.s32.totalorder %s54, %s55
      %p66 = scmp.eq.s32.totalorder %s32, 0
      %p67 = por %p65, %p66
      %p68 = scmp.ne.s32.totalorder %s54, %s55
      %p69 = scmp.eq.s32.totalorder %s33, 1
      %p70 = por %p68, %p69
      %p72 = scmp.ne.s32.totalorder %s55, %s71
      %p73 = scmp.eq.s32.totalorder %s33, 0
      %p74 = por %p72, %p73
      %s75 = ssub.s32 %s34, %s46
      %s76 = ssub.s32 %s35, %s42
      %s77 = sor.u32 %s75, %s76
      %p78 = scmp.eq.s32.totalorder %s77, 0
      %s80 = sadd.s32 %s79, 1
      %s81 = scalar_select %p78, %s79, %s80
      %p84 = pneg %p78
      %p85 = scmp.eq.s32.totalorder %s27, 1
      %p86 = por %p84, %p85
      %p87 = scmp.ne.s32.totalorder %s79, %s82
      %p88 = scmp.eq.s32.totalorder %s27, 0
      %p89 = por %p87, %p88
      %p90 = scmp.ne.s32.totalorder %s79, %s82
      %p91 = scmp.eq.s32.totalorder %s32, 1
      %p92 = por %p90, %p91
      %p93 = scmp.ne.s32.totalorder %s82, %s83
      %p94 = scmp.eq.s32.totalorder %s32, 0
      %p95 = por %p93, %p94
      %p96 = scmp.ne.s32.totalorder %s82, %s83
      %p97 = scmp.eq.s32.totalorder %s33, 1
      %p98 = por %p96, %p97
      %p100 = scmp.ne.s32.totalorder %s83, %s99
      %p101 = scmp.eq.s32.totalorder %s33, 0
      %p102 = por %p100, %p101
      %s104 = sadd.s32 %s103, 1
      %p107 = scmp.eq.s32.totalorder %s27, 1
      %p108 = scmp.ne.s32.totalorder %s103, %s105
      %p109 = scmp.eq.s32.totalorder %s27, 0
      %p110 = por %p108, %p109
      %p111 = scmp.ne.s32.totalorder %s103, %s105
      %p112 = scmp.eq.s32.totalorder %s32, 1
      %p113 = por %p111, %p112
      %p114 = scmp.ne.s32.totalorder %s105, %s106
      %p115 = scmp.eq.s32.totalorder %s32, 0
      %p116 = por %p114, %p115
      %p117 = scmp.ne.s32.totalorder %s105, %s106
      %p118 = scmp.eq.s32.totalorder %s33, 1
      %p119 = por %p117, %p118
      %p121 = scmp.ne.s32.totalorder %s106, %s120
      %p122 = scmp.eq.s32.totalorder %s33, 0
      %p123 = por %p121, %p122
      %s125 = sadd.s32 %s124, 1
      %p128 = scmp.eq.s32.totalorder %s27, 1
      %p129 = scmp.ne.s32.totalorder %s124, %s126
      %p130 = scmp.eq.s32.totalorder %s27, 0
      %p131 = por %p129, %p130
      %p132 = scmp.ne.s32.totalorder %s124, %s126
      %p133 = scmp.eq.s32.totalorder %s32, 1
      %p134 = por %p132, %p133
      %p135 = scmp.ne.s32.totalorder %s126, %s127
      %p136 = scmp.eq.s32.totalorder %s32, 0
      %p137 = por %p135, %p136
      %p138 = scmp.ne.s32.totalorder %s126, %s127
      %p139 = scmp.eq.s32.totalorder %s33, 1
      %p140 = por %p138, %p139
      %p142 = scmp.ne.s32.totalorder %s127, %s141
      %p143 = scmp.eq.s32.totalorder %s33, 0
      %p144 = por %p142, %p143
      %s146 = sadd.s32 %s145, 1
      %p149 = scmp.eq.s32.totalorder %s27, 1
      %p150 = scmp.ne.s32.totalorder %s145, %s147
      %p151 = scmp.eq.s32.totalorder %s27, 0
      %p152 = por %p150, %p151
      %p153 = scmp.ne.s32.totalorder %s145, %s147
      %p154 = scmp.eq.s32.totalorder %s32, 1
      %p155 = por %p153, %p154
      %p156 = scmp.ne.s32.totalorder %s147, %s148
      %p157 = scmp.eq.s32.totalorder %s32, 0
      %p158 = por %p156, %p157
      %p159 = scmp.ne.s32.totalorder %s147, %s148
      %p160 = scmp.eq.s32.totalorder %s33, 1
      %p161 = por %p159, %p160
      %p163 = scmp.ne.s32.totalorder %s148, %s162
      %p164 = scmp.eq.s32.totalorder %s33, 0
      %p165 = por %p163, %p164
      %s167 = sadd.s32 %s166, 1
      %p170 = scmp.eq.s32.totalorder %s27, 1
      %p171 = scmp.ne.s32.totalorder %s166, %s168
      %p172 = scmp.eq.s32.totalorder %s27, 0
      %p173 = por %p171, %p172
      %p174 = scmp.ne.s32.totalorder %s166, %s168
      %p175 = scmp.eq.s32.totalorder %s32, 1
      %p176 = por %p174, %p175
      %p177 = scmp.ne.s32.totalorder %s168, %s169
      %p178 = scmp.eq.s32.totalorder %s32, 0
      %p179 = por %p177, %p178
      %p180 = scmp.ne.s32.totalorder %s168, %s169
      %p181 = scmp.eq.s32.totalorder %s33, 1
      %p182 = por %p180, %p181
      %p184 = scmp.ne.s32.totalorder %s169, %s183
      %p185 = scmp.eq.s32.totalorder %s33, 0
      %p186 = por %p184, %p185
      %s188 = sadd.s32 %s187, 1
      %p191 = scmp.eq.s32.totalorder %s27, 1
      %p192 = scmp.ne.s32.totalorder %s187, %s189
      %p193 = scmp.eq.s32.totalorder %s27, 0
      %p194 = por %p192, %p193
      %p195 = scmp.ne.s32.totalorder %s187, %s189
      %p196 = scmp.eq.s32.totalorder %s32, 1
      %p197 = por %p195, %p196
      %p198 = scmp.ne.s32.totalorder %s189, %s190
      %p199 = scmp.eq.s32.totalorder %s32, 0
      %p200 = por %p198, %p199
      %p201 = scmp.ne.s32.totalorder %s189, %s190
      %p202 = scmp.eq.s32.totalorder %s33, 1
      %p203 = por %p201, %p202
      %p205 = scmp.ne.s32.totalorder %s190, %s204
      %p206 = scmp.eq.s32.totalorder %s33, 0
      %p207 = por %p205, %p206
      %s209 = sadd.s32 %s208, 1
      %p212 = scmp.eq.s32.totalorder %s27, 1
      %p213 = scmp.ne.s32.totalorder %s208, %s210
      %p214 = scmp.eq.s32.totalorder %s27, 0
      %p215 = por %p213, %p214
      %p216 = scmp.ne.s32.totalorder %s208, %s210
      %p217 = scmp.eq.s32.totalorder %s32, 1
      %p218 = por %p216, %p217
      %p219 = scmp.ne.s32.totalorder %s210, %s211
      %p220 = scmp.eq.s32.totalorder %s32, 0
      %p221 = por %p219, %p220
      %p222 = scmp.ne.s32.totalorder %s210, %s211
      %p223 = scmp.eq.s32.totalorder %s33, 1
      %p224 = por %p222, %p223
      %p226 = scmp.ne.s32.totalorder %s211, %s225
      %p227 = scmp.eq.s32.totalorder %s33, 0
      %p228 = por %p226, %p227
      %s230 = sadd.s32 %s229, 1
      %p233 = scmp.eq.s32.totalorder %s27, 1
      %p234 = scmp.ne.s32.totalorder %s229, %s231
      %p235 = scmp.eq.s32.totalorder %s27, 0
      %p236 = por %p234, %p235
      %p237 = scmp.ne.s32.totalorder %s229, %s231
      %p238 = scmp.eq.s32.totalorder %s32, 1
      %p239 = por %p237, %p238
      %p240 = scmp.ne.s32.totalorder %s231, %s232
      %p241 = scmp.eq.s32.totalorder %s32, 0
      %p242 = por %p240, %p241
      %p243 = scmp.ne.s32.totalorder %s231, %s232
      %p244 = scmp.eq.s32.totalorder %s33, 1
      %p245 = por %p243, %p244
      %p247 = scmp.ne.s32.totalorder %s232, %s246
      %p248 = scmp.eq.s32.totalorder %s33, 0
      %p249 = por %p247, %p248
      %s250 = ssub.s32 %s34, %s46
      %s251 = ssub.s32 %s35, %s42
      %s252 = sor.u32 %s250, %s251
      %p253 = scmp.eq.s32.totalorder %s252, 0
      %s255 = sadd.s32 %s254, 1
      %s256 = scalar_select %p253, %s254, %s255
      %p259 = pneg %p253
      %p260 = scmp.eq.s32.totalorder %s27, 1
      %p261 = por %p259, %p260
      %p262 = scmp.ne.s32.totalorder %s254, %s257
      %p263 = scmp.eq.s32.totalorder %s27, 0
      %p264 = por %p262, %p263
      %p265 = scmp.ne.s32.totalorder %s254, %s257
      %p266 = scmp.eq.s32.totalorder %s32, 1
      %p267 = por %p265, %p266
      %p268 = scmp.ne.s32.totalorder %s257, %s258
      %p269 = scmp.eq.s32.totalorder %s32, 0
      %p270 = por %p268, %p269
      %p271 = scmp.ne.s32.totalorder %s257, %s258
      %p272 = scmp.eq.s32.totalorder %s33, 1
      %p273 = por %p271, %p272
      %p275 = scmp.ne.s32.totalorder %s258, %s274
      %p276 = scmp.eq.s32.totalorder %s33, 0
      %p277 = por %p275, %p276
      %s278 = ssub.s32 %s34, %s46
      %s279 = ssub.s32 %s35, %s42
      %s280 = sor.u32 %s278, %s279
      %p281 = scmp.eq.s32.totalorder %s280, 0
      %s283 = sadd.s32 %s282, 1
      %s284 = scalar_select %p281, %s282, %s283
      %p287 = pneg %p281
      %p288 = scmp.eq.s32.totalorder %s27, 1
      %p289 = por %p287, %p288
      %p290 = scmp.ne.s32.totalorder %s282, %s285
      %p291 = scmp.eq.s32.totalorder %s27, 0
      %p292 = por %p290, %p291
      %p293 = scmp.ne.s32.totalorder %s282, %s285
      %p294 = scmp.eq.s32.totalorder %s32, 1
      %p295 = por %p293, %p294
      %p296 = scmp.ne.s32.totalorder %s285, %s286
      %p297 = scmp.eq.s32.totalorder %s32, 0
      %p298 = por %p296, %p297
      %p299 = scmp.ne.s32.totalorder %s285, %s286
      %p300 = scmp.eq.s32.totalorder %s33, 1
      %p301 = por %p299, %p300
      %p303 = scmp.ne.s32.totalorder %s286, %s302
      %p304 = scmp.eq.s32.totalorder %s33, 0
      %p305 = por %p303, %p304
      %s306 = ssub.s32 %s34, %s46
      %s307 = ssub.s32 %s35, %s42
      %s308 = sor.u32 %s306, %s307
      %p309 = scmp.eq.s32.totalorder %s308, 0
      %s311 = sadd.s32 %s310, 1
      %s312 = scalar_select %p309, %s310, %s311
      %p315 = pneg %p309
      %p316 = scmp.eq.s32.totalorder %s27, 1
      %p317 = por %p315, %p316
      %p318 = scmp.ne.s32.totalorder %s310, %s313
      %p319 = scmp.eq.s32.totalorder %s27, 0
      %p320 = por %p318, %p319
      %p321 = scmp.ne.s32.totalorder %s310, %s313
      %p322 = scmp.eq.s32.totalorder %s32, 1
      %p323 = por %p321, %p322
      %p324 = scmp.ne.s32.totalorder %s313, %s314
      %p325 = scmp.eq.s32.totalorder %s32, 0
      %p326 = por %p324, %p325
      %p327 = scmp.ne.s32.totalorder %s313, %s314
      %p328 = scmp.eq.s32.totalorder %s33, 1
      %p329 = por %p327, %p328
      %p331 = scmp.ne.s32.totalorder %s314, %s330
      %p332 = scmp.eq.s32.totalorder %s33, 0
      %p333 = por %p331, %p332
      %p334 = scmp.le.s32.totalorder 1, %s27
      %p335 = scmp.lt.s32.totalorder %s27, 3
      %p336 = pnand %p334, %p335
      %p337 = pneg %p336
      // Predicated region
      $region9: #{tpu_custom_call.1} parent=5 // pred_check
        _
      $region10: #{tpu_custom_call.1} parent=5 // pred_check_branch
        %339 = sbr.rel (%p336) target = $region12
      $region11: #{tpu_custom_call.1} parent=5 // pred_region
        %s340 = ssub.s32 %s27, 1
        // Predicated region
        $region13: #{tpu_custom_call.1} parent=11 // pred_check
          %p341 = pneg %p116
        $region14: #{tpu_custom_call.1} parent=11 // pred_check_branch
          %343 = sbr.rel (%p341) target = $region16
        $region15: #{tpu_custom_call.1} parent=11 // pred_region
          _
        $region16: #{tpu_custom_call.1} parent=11 // pred_fallthru
          _
        // Predicated region
        $region17: #{tpu_custom_call.1} parent=11 // pred_check
          %p344 = pneg %p137
        $region18: #{tpu_custom_call.1} parent=11 // pred_check_branch
          %346 = sbr.rel (%p344) target = $region20
        $region19: #{tpu_custom_call.1} parent=11 // pred_region
          _
        $region20: #{tpu_custom_call.1} parent=11 // pred_fallthru
          _
        // Predicated region
        $region21: #{tpu_custom_call.1} parent=11 // pred_check
          %p347 = pneg %p158
        $region22: #{tpu_custom_call.1} parent=11 // pred_check_branch
          %349 = sbr.rel (%p347) target = $region24
        $region23: #{tpu_custom_call.1} parent=11 // pred_region
          _
        $region24: #{tpu_custom_call.1} parent=11 // pred_fallthru
          _
        // Predicated region
        $region25: #{tpu_custom_call.1} parent=11 // pred_check
          %p350 = pneg %p179
        $region26: #{tpu_custom_call.1} parent=11 // pred_check_branch
          %352 = sbr.rel (%p350) target = $region28
        $region27: #{tpu_custom_call.1} parent=11 // pred_region
          _
        $region28: #{tpu_custom_call.1} parent=11 // pred_fallthru
          _
        // Predicated region
        $region29: #{tpu_custom_call.1} parent=11 // pred_check
          %p353 = pneg %p200
        $region30: #{tpu_custom_call.1} parent=11 // pred_check_branch
          %355 = sbr.rel (%p353) target = $region32
        $region31: #{tpu_custom_call.1} parent=11 // pred_region
          _
        $region32: #{tpu_custom_call.1} parent=11 // pred_fallthru
          _
        // Predicated region
        $region33: #{tpu_custom_call.1} parent=11 // pred_check
          %p356 = pneg %p221
        $region34: #{tpu_custom_call.1} parent=11 // pred_check_branch
          %358 = sbr.rel (%p356) target = $region36
        $region35: #{tpu_custom_call.1} parent=11 // pred_region
          _
        $region36: #{tpu_custom_call.1} parent=11 // pred_fallthru
          _
        // Predicated region
        $region37: #{tpu_custom_call.1} parent=11 // pred_check
          %p359 = pneg %p242
        $region38: #{tpu_custom_call.1} parent=11 // pred_check_branch
          %361 = sbr.rel (%p359) target = $region40
        $region39: #{tpu_custom_call.1} parent=11 // pred_region
          _
        $region40: #{tpu_custom_call.1} parent=11 // pred_fallthru
          _
      $region12: #{tpu_custom_call.1} parent=5 // pred_fallthru
        _
      %p362 = scmp.lt.s32.totalorder %s27, 2
      // Predicated region
      $region41: #{tpu_custom_call.1} parent=5 // pred_check
        %p363 = pneg %p362
      $region42: #{tpu_custom_call.1} parent=5 // pred_check_branch
        %365 = sbr.rel (%p363) target = $region44
      $region43: #{tpu_custom_call.1} parent=5 // pred_region
        // Predicated region
        $region45: #{tpu_custom_call.1} parent=43 // pred_check
          %p366 = pneg %p61
        $region46: #{tpu_custom_call.1} parent=43 // pred_check_branch
          %368 = sbr.rel (%p366) target = $region48
        $region47: #{tpu_custom_call.1} parent=43 // pred_region
          %s369 = sand.u32 %s51, 1
          %s370 = scalar_lea.sflag [#allocation3], %s369
          %s371 = sand.u32 %s51, 1
          %s372 = smul.addr %s371, 8
          %s373 = scalar_lea.vmem [#allocation2], %s372
          %s374 = smul.u32 2, %s35
          %s376 = ssub.s32 128, 128
          %377 = vsyncadd %s370, %s376
          %s378 = smul.addr %s34, 2
          %s379 = sadd.s32 %s374, %s378
          %s380 = smul.addr %s379, 64
          %s381 = scalar_lea.hbm %s0, %s380
          %s383 = sshll.u32 %s373, 4
          %s384 = int_to_ptr.vmem [resolvable:$true] %s383
          %386 = dma.hbm_to_vmem [thread:$0]  %s381, 128, %s384, %s370
        $region48: #{tpu_custom_call.1} parent=43 // pred_fallthru
          _
        // Predicated region
        $region49: #{tpu_custom_call.1} parent=43 // pred_check
          %p387 = pneg %p89
        $region50: #{tpu_custom_call.1} parent=43 // pred_check_branch
          %389 = sbr.rel (%p387) target = $region52
        $region51: #{tpu_custom_call.1} parent=43 // pred_region
          %s390 = smul.u32 2, %s35
          %p391 = scmp.lt.s32.totalorder %s34, 1
          %s392 = scalar_select %p391, %s34, 1
          %p393 = scmp.lt.s32.totalorder %s390, 1
          %s394 = scalar_select %p393, %s390, 1
          %s395 = smul.addr %s392, 2
          %s396 = sadd.s32 %s394, %s395
          %s397 = smul.addr %s396, 4
          %s398 = scalar_lea.vmem %s1, %s397
          %s399 = smul.u32 2, %s35
        $region52: #{tpu_custom_call.1} parent=43 // pred_fallthru
          _
      $region44: #{tpu_custom_call.1} parent=5 // pred_fallthru
        _
      %p400 = scmp.le.s32.totalorder 1, %s27
      %p401 = scmp.lt.s32.totalorder %s27, 3
      %p402 = pnand %p400, %p401
      %p403 = pneg %p402
      // Predicated region
      $region53: #{tpu_custom_call.1} parent=5 // pred_check
        _
      $region54: #{tpu_custom_call.1} parent=5 // pred_check_branch
        %405 = sbr.rel (%p402) target = $region56
      $region55: #{tpu_custom_call.1} parent=5 // pred_region
        %s406 = ssub.s32 %s27, 1
        %s407 = sand.u32 %s54, 1
        %s408 = scalar_lea.sflag [#allocation3], %s407
        %s409 = sand.u32 %s54, 1
        %s410 = smul.addr %s409, 8
        %s411 = scalar_lea.vmem [#allocation2], %s410
        // Predicated region
        $region57: #{tpu_custom_call.1} parent=55 // pred_check
          %p412 = pneg %p67
        $region58: #{tpu_custom_call.1} parent=55 // pred_check_branch
          %414 = sbr.rel (%p412) target = $region60
        $region59: #{tpu_custom_call.1} parent=55 // pred_region
          %415 = dma.done %s408, 128
        $region60: #{tpu_custom_call.1} parent=55 // pred_fallthru
          _
        %s416 = sand.u32 %s54, 1
        %s417 = scalar_lea.sflag [#allocation3], %s416
        %s418 = sand.u32 %s54, 1
        %s419 = smul.addr %s418, 8
        %s420 = scalar_lea.vmem [#allocation2], %s419
        %p421 = pneg %p67
        %p422 = pneg %p64
        %s423 = smul.u32 2, %s37
        %p424 = scmp.lt.s32.totalorder %s36, 1
        %s425 = scalar_select %p424, %s36, 1
        %p426 = scmp.lt.s32.totalorder %s423, 1
        %s427 = scalar_select %p426, %s423, 1
        %s428 = smul.addr %s425, 2
        %s429 = sadd.s32 %s427, %s428
        %s430 = smul.addr %s429, 4
        %s431 = scalar_lea.vmem %s1, %s430
        %p432 = pneg %p95
        %p433 = pneg %p92
        %p434 = pneg %p116
        %p435 = pneg %p113
        %p436 = pneg %p137
        %p437 = pneg %p134
        %p438 = pneg %p158
        %p439 = pneg %p155
        %p440 = pneg %p179
        %p441 = pneg %p176
        %p442 = pneg %p200
        %p443 = pneg %p197
        %p444 = pneg %p221
        %p445 = pneg %p218
        %p446 = pneg %p242
        %p447 = pneg %p239
        %p448 = pneg %p270
        %p449 = pneg %p267
        %s450 = sand.u32 %s257, 1
        %s451 = scalar_lea.sflag [#allocation4], %s450
        %s452 = sand.u32 %s257, 1
        %s453 = smul.addr %s452, 8
        %s454 = scalar_lea.vmem [#allocation5], %s453
        %p455 = pneg %p298
        %p456 = pneg %p295
        %s457 = sand.u32 %s32, 1
        %s458 = scalar_lea.sflag [#allocation7], %s457
        %s459 = sand.u32 %s285, 1
        %s460 = smul.addr %s459, 8
        %s461 = scalar_lea.vmem [#allocation6], %s460
        %p462 = pneg %p326
        %p463 = pneg %p323
        %s464 = sand.u32 %s32, 1
        %s465 = scalar_lea.sflag [#allocation7], %s464
        %s466 = sand.u32 %s313, 1
        %s467 = smul.addr %s466, 8
        %s468 = scalar_lea.vmem [#allocation8], %s467
        %s469 = smul.u32 2, %s37
        %s470 = smul.u32 2, %s37
        %p471 = scmp.lt.s32.totalorder %s36, 1
        %s472 = scalar_select %p471, %s36, 1
        %p473 = scmp.lt.s32.totalorder %s470, 1
        %s474 = scalar_select %p473, %s470, 1
        %s475 = smul.addr %s472, 2
        %s476 = sadd.s32 %s474, %s475
        %s477 = smul.addr %s476, 4
        %s478 = scalar_lea.vmem %s1, %s477
        %s479 = smul.u32 2, %s37
        %s480 = smul.u32 2, %s37
        %s481 = smul.u32 2, %s37
        %s482 = smul.u32 2, %s37
        %v483 = vld [vmem:[%s411] sm:$0xff]
        %v484 = vld [vmem:[%s478] sm:$0xff]
        %v485 = vld [vmem:[%s2] sm:$0xf]
        %v486 = vld [vmem:[%s3] sm:$0xf]
        %v488 = vcombine.high %v484, %v484
        %vm489 = vcmask 31744
        %v491 = vsel %vm489, %v486, 0
        %vm493 = vcmask 1043456
        %v494 = vsel %vm493, %v484, 0
        %v496 = vsel %vm493, %v488, 0
        %498 = vmatprep.subr.mxu0 %v496
        %499 = vmatpush1.msra.mxu0 %v494
        %500 = vmatprep.subr.mxu0 0.0
        %501 = vmatpush1.msra.mxu0 0.0
        %502 = vmatprep.subr.mxu0 0.0
        %503 = vmatpush1.msra.mxu0 0.0
        %504 = vmatprep.subr.mxu0 0.0
        %505 = vmatpush1.msra.mxu0 0.0
        %506 = vmatprep.subr.mxu0 0.0
        %507 = vmatpush1.msra.mxu0 0.0
        %508 = vmatprep.subr.mxu0 0.0
        %509 = vmatpush1.msra.mxu0 0.0
        %510 = vmatprep.subr.mxu0 0.0
        %511 = vmatpush1.msra.mxu0 0.0
        %512 = vmatprep.subr.mxu0 0.0
        %513 = vmatpush1.msra.mxu0 0.0
        %514 = vmatprep.subr.mxu0 0.0
        %515 = vmatpush1.msra.mxu0 0.0
        %516 = vmatprep.subr.mxu0 0.0
        %517 = vmatpush1.msra.mxu0 0.0
        %518 = vmatprep.subr.mxu0 0.0
        %519 = vmatpush1.msra.mxu0 0.0
        %520 = vmatprep.subr.mxu0 0.0
        %521 = vmatpush1.msra.mxu0 0.0
        %522 = vmatprep.subr.mxu0 0.0
        %523 = vmatpush1.msra.mxu0 0.0
        %524 = vmatprep.subr.mxu0 0.0
        %525 = vmatpush1.msra.mxu0 0.0
        %526 = vmatprep.subr.mxu0 0.0
        %527 = vmatpush1.msra.mxu0 0.0
        %528 = vmatprep.subr.mxu0 0.0
        %529 = vmatpush1.msra.mxu0 0.0
        %530 = vmatprep.subr.mxu0 0.0
        %531 = vmatpush1.msra.mxu0 0.0
        %532 = vmatprep.subr.mxu0 0.0
        %533 = vmatpush1.msra.mxu0 0.0
        %534 = vmatprep.subr.mxu0 0.0
        %535 = vmatpush1.msra.mxu0 0.0
        %536 = vmatprep.subr.mxu0 0.0
        %537 = vmatpush1.msra.mxu0 0.0
        %538 = vmatprep.subr.mxu0 0.0
        %539 = vmatpush1.msra.mxu0 0.0
        %540 = vmatprep.subr.mxu0 0.0
        %541 = vmatpush1.msra.mxu0 0.0
        %542 = vmatprep.subr.mxu0 0.0
        %543 = vmatpush1.msra.mxu0 0.0
        %544 = vmatprep.subr.mxu0 0.0
        %545 = vmatpush1.msra.mxu0 0.0
        %546 = vmatprep.subr.mxu0 0.0
        %547 = vmatpush1.msra.mxu0 0.0
        %548 = vmatprep.subr.mxu0 0.0
        %549 = vmatpush1.msra.mxu0 0.0
        %550 = vmatprep.subr.mxu0 0.0
        %551 = vmatpush1.msra.mxu0 0.0
        %552 = vmatprep.subr.mxu0 0.0
        %553 = vmatpush1.msra.mxu0 0.0
        %554 = vmatprep.subr.mxu0 0.0
        %555 = vmatpush1.msra.mxu0 0.0
        %556 = vmatprep.subr.mxu0 0.0
        %557 = vmatpush1.msra.mxu0 0.0
        %558 = vmatprep.subr.mxu0 0.0
        %559 = vmatpush1.msra.mxu0 0.0
        %560 = vmatprep.subr.mxu0 0.0
        %561 = vmatpush1.msra.mxu0 0.0
        %562 = vmatprep.mubr.f32.mxu0 0.0
        %563 = vmatmul.mubr.f32.gmra.mrb[0].mxu0 %v491
        %v564 = vpop.f32.mrb[0].mxu0
        %v565 = vadd.f32 0.0, %v564
        %v566 = vpop.f32.mrb[0].mxu0
        %v567 = vadd.f32 0.0, %v566
        %568 = vdwg.mxu0
        %v570 = vcombine.high %v483, %v483
        %v572 = vsel %vm489, %v485, 0
        %v574 = vsel %vm493, %v483, 0
        %v576 = vsel %vm493, %v570, 0
        %578 = vmatprep.subr.mxu0 %v576
        %579 = vmatpush1.msra.mxu0 %v574
        %580 = vmatprep.subr.mxu0 0.0
        %581 = vmatpush1.msra.mxu0 0.0
        %582 = vmatprep.subr.mxu0 0.0
        %583 = vmatpush1.msra.mxu0 0.0
        %584 = vmatprep.subr.mxu0 0.0
        %585 = vmatpush1.msra.mxu0 0.0
        %586 = vmatprep.subr.mxu0 0.0
        %587 = vmatpush1.msra.mxu0 0.0
        %588 = vmatprep.subr.mxu0 0.0
        %589 = vmatpush1.msra.mxu0 0.0
        %590 = vmatprep.subr.mxu0 0.0
        %591 = vmatpush1.msra.mxu0 0.0
        %592 = vmatprep.subr.mxu0 0.0
        %593 = vmatpush1.msra.mxu0 0.0
        %594 = vmatprep.subr.mxu0 0.0
        %595 = vmatpush1.msra.mxu0 0.0
        %596 = vmatprep.subr.mxu0 0.0
        %597 = vmatpush1.msra.mxu0 0.0
        %598 = vmatprep.subr.mxu0 0.0
        %599 = vmatpush1.msra.mxu0 0.0
        %600 = vmatprep.subr.mxu0 0.0
        %601 = vmatpush1.msra.mxu0 0.0
        %602 = vmatprep.subr.mxu0 0.0
        %603 = vmatpush1.msra.mxu0 0.0
        %604 = vmatprep.subr.mxu0 0.0
        %605 = vmatpush1.msra.mxu0 0.0
        %606 = vmatprep.subr.mxu0 0.0
        %607 = vmatpush1.msra.mxu0 0.0
        %608 = vmatprep.subr.mxu0 0.0
        %609 = vmatpush1.msra.mxu0 0.0
        %610 = vmatprep.subr.mxu0 0.0
        %611 = vmatpush1.msra.mxu0 0.0
        %612 = vmatprep.subr.mxu0 0.0
        %613 = vmatpush1.msra.mxu0 0.0
        %614 = vmatprep.subr.mxu0 0.0
        %615 = vmatpush1.msra.mxu0 0.0
        %616 = vmatprep.subr.mxu0 0.0
        %617 = vmatpush1.msra.mxu0 0.0
        %618 = vmatprep.subr.mxu0 0.0
        %619 = vmatpush1.msra.mxu0 0.0
        %620 = vmatprep.subr.mxu0 0.0
        %621 = vmatpush1.msra.mxu0 0.0
        %622 = vmatprep.subr.mxu0 0.0
        %623 = vmatpush1.msra.mxu0 0.0
        %624 = vmatprep.subr.mxu0 0.0
        %625 = vmatpush1.msra.mxu0 0.0
        %626 = vmatprep.subr.mxu0 0.0
        %627 = vmatpush1.msra.mxu0 0.0
        %628 = vmatprep.subr.mxu0 0.0
        %629 = vmatpush1.msra.mxu0 0.0
        %630 = vmatprep.subr.mxu0 0.0
        %631 = vmatpush1.msra.mxu0 0.0
        %632 = vmatprep.subr.mxu0 0.0
        %633 = vmatpush1.msra.mxu0 0.0
        %634 = vmatprep.subr.mxu0 0.0
        %635 = vmatpush1.msra.mxu0 0.0
        %636 = vmatprep.subr.mxu0 0.0
        %637 = vmatpush1.msra.mxu0 0.0
        %638 = vmatprep.subr.mxu0 0.0
        %639 = vmatpush1.msra.mxu0 0.0
        %640 = vmatprep.subr.mxu0 0.0
        %641 = vmatpush1.msra.mxu0 0.0
        %642 = vmatprep.mubr.f32.mxu0 0.0
        %643 = vmatmul.mubr.f32.gmra.mrb[0].mxu0 %v572
        %v644 = vpop.f32.mrb[0].mxu0
        %v645 = vadd.f32 %v565, %v644
        %v646 = vpop.f32.mrb[0].mxu0
        %v647 = vadd.f32 %v567, %v646
        %648 = vdwg.mxu0
        %v649 = vld [vmem:[%s4] sm:$0xf]
        %651 = vset.pattern.permute.xlu0 0
        %652 = vperm.xlu0 %651, %v649
        %v653 = vpop.permute.xlu0 %652
        %v655 = vadd.f32 %v645, %v653
        %v656 = vadd.f32 %v647, %v653
        %v657 = vmax.f32 %v655, 0.0
        %v658 = vmax.f32 %v656, 0.0
        %v659 = vld [vmem:[%s5] sm:$0xf]
        %v660 = vld [vmem:[%s6] sm:$0xf]
        %662 = vset.pattern.permute.xlu0 0
        %663 = vperm.xlu0 %662, %v660
        %v664 = vpop.permute.xlu0 %663
        %v667 = vsel %vm489, %v659, 0
        %v670 = vsel %vm493, %v657, 0
        %v673 = vsel %vm493, %v658, 0
        %675 = vmatprep.subr.mxu0 %v673
        %676 = vmatpush1.msra.mxu0 %v670
        %677 = vmatprep.subr.mxu0 0.0
        %678 = vmatpush1.msra.mxu0 0.0
        %679 = vmatprep.subr.mxu0 0.0
        %680 = vmatpush1.msra.mxu0 0.0
        %681 = vmatprep.subr.mxu0 0.0
        %682 = vmatpush1.msra.mxu0 0.0
        %683 = vmatprep.subr.mxu0 0.0
        %684 = vmatpush1.msra.mxu0 0.0
        %685 = vmatprep.subr.mxu0 0.0
        %686 = vmatpush1.msra.mxu0 0.0
        %687 = vmatprep.subr.mxu0 0.0
        %688 = vmatpush1.msra.mxu0 0.0
        %689 = vmatprep.subr.mxu0 0.0
        %690 = vmatpush1.msra.mxu0 0.0
        %691 = vmatprep.subr.mxu0 0.0
        %692 = vmatpush1.msra.mxu0 0.0
        %693 = vmatprep.subr.mxu0 0.0
        %694 = vmatpush1.msra.mxu0 0.0
        %695 = vmatprep.subr.mxu0 0.0
        %696 = vmatpush1.msra.mxu0 0.0
        %697 = vmatprep.subr.mxu0 0.0
        %698 = vmatpush1.msra.mxu0 0.0
        %699 = vmatprep.subr.mxu0 0.0
        %700 = vmatpush1.msra.mxu0 0.0
        %701 = vmatprep.subr.mxu0 0.0
        %702 = vmatpush1.msra.mxu0 0.0
        %703 = vmatprep.subr.mxu0 0.0
        %704 = vmatpush1.msra.mxu0 0.0
        %705 = vmatprep.subr.mxu0 0.0
        %706 = vmatpush1.msra.mxu0 0.0
        %707 = vmatprep.subr.mxu0 0.0
        %708 = vmatpush1.msra.mxu0 0.0
        %709 = vmatprep.subr.mxu0 0.0
        %710 = vmatpush1.msra.mxu0 0.0
        %711 = vmatprep.subr.mxu0 0.0
        %712 = vmatpush1.msra.mxu0 0.0
        %713 = vmatprep.subr.mxu0 0.0
        %714 = vmatpush1.msra.mxu0 0.0
        %715 = vmatprep.subr.mxu0 0.0
        %716 = vmatpush1.msra.mxu0 0.0
        %717 = vmatprep.subr.mxu0 0.0
        %718 = vmatpush1.msra.mxu0 0.0
        %719 = vmatprep.subr.mxu0 0.0
        %720 = vmatpush1.msra.mxu0 0.0
        %721 = vmatprep.subr.mxu0 0.0
        %722 = vmatpush1.msra.mxu0 0.0
        %723 = vmatprep.subr.mxu0 0.0
        %724 = vmatpush1.msra.mxu0 0.0
        %725 = vmatprep.subr.mxu0 0.0
        %726 = vmatpush1.msra.mxu0 0.0
        %727 = vmatprep.subr.mxu0 0.0
        %728 = vmatpush1.msra.mxu0 0.0
        %729 = vmatprep.subr.mxu0 0.0
        %730 = vmatpush1.msra.mxu0 0.0
        %731 = vmatprep.subr.mxu0 0.0
        %732 = vmatpush1.msra.mxu0 0.0
        %733 = vmatprep.subr.mxu0 0.0
        %734 = vmatpush1.msra.mxu0 0.0
        %735 = vmatprep.subr.mxu0 0.0
        %736 = vmatpush1.msra.mxu0 0.0
        %737 = vmatprep.subr.mxu0 0.0
        %738 = vmatpush1.msra.mxu0 0.0
        %739 = vmatprep.mubr.f32.mxu0 0.0
        %740 = vmatmul.mubr.f32.gmra.mrb[0].mxu0 %v667
        %v741 = vpop.f32.mrb[0].mxu0
        %v742 = vadd.f32 %v664, %v741
        %v743 = vpop.f32.mrb[0].mxu0
        %v744 = vadd.f32 %v664, %v743
        %745 = vdwg.mxu0
        %v746 = vxor.u32 %v742, 2147483648
        %v747 = vxor.u32 %v744, 2147483648
        %v748 = vmul.f32 %v746, 1.442695
        %v749 = vpow.pop %v748
        %v750 = vmul.f32 %v747, 1.442695
        %v751 = vpow.pop %v750
        %v752 = vadd.f32 %v749, 1.0
        %v753 = vadd.f32 %v751, 1.0
        %v754 = vrcp.pop %v752
        %v755 = vmul.f32 1.0, %v754
        %v756 = vrcp.pop %v753
        %v757 = vmul.f32 1.0, %v756
        %v758 = vld [vmem:[%s7] sm:$0xf]
        %v759 = vld [vmem:[%s8] sm:$0xf]
        %761 = vset.pattern.permute.xlu0 0
        %762 = vperm.xlu0 %761, %v759
        %v763 = vpop.permute.xlu0 %762
        %v766 = vsel %vm489, %v758, 0
        %768 = vmatprep.subr.mxu0 %v673
        %769 = vmatpush1.msra.mxu0 %v670
        %770 = vmatprep.subr.mxu0 0.0
        %771 = vmatpush1.msra.mxu0 0.0
        %772 = vmatprep.subr.mxu0 0.0
        %773 = vmatpush1.msra.mxu0 0.0
        %774 = vmatprep.subr.mxu0 0.0
        %775 = vmatpush1.msra.mxu0 0.0
        %776 = vmatprep.subr.mxu0 0.0
        %777 = vmatpush1.msra.mxu0 0.0
        %778 = vmatprep.subr.mxu0 0.0
        %779 = vmatpush1.msra.mxu0 0.0
        %780 = vmatprep.subr.mxu0 0.0
        %781 = vmatpush1.msra.mxu0 0.0
        %782 = vmatprep.subr.mxu0 0.0
        %783 = vmatpush1.msra.mxu0 0.0
        %784 = vmatprep.subr.mxu0 0.0
        %785 = vmatpush1.msra.mxu0 0.0
        %786 = vmatprep.subr.mxu0 0.0
        %787 = vmatpush1.msra.mxu0 0.0
        %788 = vmatprep.subr.mxu0 0.0
        %789 = vmatpush1.msra.mxu0 0.0
        %790 = vmatprep.subr.mxu0 0.0
        %791 = vmatpush1.msra.mxu0 0.0
        %792 = vmatprep.subr.mxu0 0.0
        %793 = vmatpush1.msra.mxu0 0.0
        %794 = vmatprep.subr.mxu0 0.0
        %795 = vmatpush1.msra.mxu0 0.0
        %796 = vmatprep.subr.mxu0 0.0
        %797 = vmatpush1.msra.mxu0 0.0
        %798 = vmatprep.subr.mxu0 0.0
        %799 = vmatpush1.msra.mxu0 0.0
        %800 = vmatprep.subr.mxu0 0.0
        %801 = vmatpush1.msra.mxu0 0.0
        %802 = vmatprep.subr.mxu0 0.0
        %803 = vmatpush1.msra.mxu0 0.0
        %804 = vmatprep.subr.mxu0 0.0
        %805 = vmatpush1.msra.mxu0 0.0
        %806 = vmatprep.subr.mxu0 0.0
        %807 = vmatpush1.msra.mxu0 0.0
        %808 = vmatprep.subr.mxu0 0.0
        %809 = vmatpush1.msra.mxu0 0.0
        %810 = vmatprep.subr.mxu0 0.0
        %811 = vmatpush1.msra.mxu0 0.0
        %812 = vmatprep.subr.mxu0 0.0
        %813 = vmatpush1.msra.mxu0 0.0
        %814 = vmatprep.subr.mxu0 0.0
        %815 = vmatpush1.msra.mxu0 0.0
        %816 = vmatprep.subr.mxu0 0.0
        %817 = vmatpush1.msra.mxu0 0.0
        %818 = vmatprep.subr.mxu0 0.0
        %819 = vmatpush1.msra.mxu0 0.0
        %820 = vmatprep.subr.mxu0 0.0
        %821 = vmatpush1.msra.mxu0 0.0
        %822 = vmatprep.subr.mxu0 0.0
        %823 = vmatpush1.msra.mxu0 0.0
        %824 = vmatprep.subr.mxu0 0.0
        %825 = vmatpush1.msra.mxu0 0.0
        %826 = vmatprep.subr.mxu0 0.0
        %827 = vmatpush1.msra.mxu0 0.0
        %828 = vmatprep.subr.mxu0 0.0
        %829 = vmatpush1.msra.mxu0 0.0
        %830 = vmatprep.subr.mxu0 0.0
        %831 = vmatpush1.msra.mxu0 0.0
        %832 = vmatprep.mubr.f32.mxu0 0.0
        %833 = vmatmul.mubr.f32.gmra.mrb[0].mxu0 %v766
        %v834 = vpop.f32.mrb[0].mxu0
        %v835 = vadd.f32 %v763, %v834
        %v836 = vpop.f32.mrb[0].mxu0
        %v837 = vadd.f32 %v763, %v836
        %838 = vdwg.mxu0
        %v839 = vxor.u32 %v835, 2147483648
        %v840 = vxor.u32 %v837, 2147483648
        %v841 = vmul.f32 %v839, 1.442695
        %v842 = vpow.pop %v841
        %v843 = vmul.f32 %v840, 1.442695
        %v844 = vpow.pop %v843
        %v845 = vadd.f32 %v842, 1.0
        %v846 = vadd.f32 %v844, 1.0
        %v847 = vrcp.pop %v845
        %v848 = vmul.f32 1.0, %v847
        %v849 = vrcp.pop %v846
        %v850 = vmul.f32 1.0, %v849
        %v853 = vcombine.low %v755, %v757
        %v855 = vmul.f32 %v483, %v853
        %v858 = vcombine.low %v848, %v850
        %v860 = vmul.f32 %v484, %v858
        %v861 = vadd.f32 %v855, %v860
        %862 = vst [vmem:[%s454] sm:$0xff] %v861
        %863 = vst [vmem:[%s461] sm:$0xff] %v855
        %864 = vst [vmem:[%s468] sm:$0xff] %v860
        %s865 = sand.u32 %s257, 1
        %s866 = scalar_lea.sflag [#allocation4], %s865
        %s867 = sand.u32 %s257, 1
        %s868 = smul.addr %s867, 8
        %s869 = scalar_lea.vmem [#allocation5], %s868
        %s870 = sand.u32 %s32, 1
        %s871 = scalar_lea.sflag [#allocation7], %s870
        %s872 = sand.u32 %s285, 1
        %s873 = smul.addr %s872, 8
        %s874 = scalar_lea.vmem [#allocation6], %s873
        %s875 = sand.u32 %s32, 1
        %s876 = scalar_lea.sflag [#allocation7], %s875
        %s877 = sand.u32 %s313, 1
        %s878 = smul.addr %s877, 8
        %s879 = scalar_lea.vmem [#allocation8], %s878
        // Predicated region
        $region61: #{tpu_custom_call.1} parent=55 // pred_check
          %p880 = pneg %p267
        $region62: #{tpu_custom_call.1} parent=55 // pred_check_branch
          %882 = sbr.rel (%p880) target = $region64
        $region63: #{tpu_custom_call.1} parent=55 // pred_region
          %s883 = smul.u32 2, %s37
          %s885 = ssub.s32 128, 128
          %886 = vsyncadd %s866, %s885
          %s887 = smul.addr %s36, 2
          %s888 = sadd.s32 %s883, %s887
          %s889 = smul.addr %s888, 64
          %s890 = scalar_lea.hbm %s9, %s889
          %s892 = sshll.u32 %s869, 4
          %s893 = int_to_ptr.vmem [resolvable:$true] %s892
          %895 = dma.vmem_to_hbm [thread:$0]  %s893, 128, %s890, %s866
        $region64: #{tpu_custom_call.1} parent=55 // pred_fallthru
          _
        // Predicated region
        $region65: #{tpu_custom_call.1} parent=55 // pred_check
          %p896 = pneg %p295
        $region66: #{tpu_custom_call.1} parent=55 // pred_check_branch
          %898 = sbr.rel (%p896) target = $region68
        $region67: #{tpu_custom_call.1} parent=55 // pred_region
          %s899 = smul.u32 2, %s37
          %s901 = ssub.s32 128, 128
          %902 = vsyncadd %s871, %s901
          %s903 = smul.addr %s36, 2
          %s904 = sadd.s32 %s899, %s903
          %s905 = smul.addr %s904, 64
          %s906 = scalar_lea.hbm %s10, %s905
          %s908 = sshll.u32 %s874, 4
          %s909 = int_to_ptr.vmem [resolvable:$true] %s908
          %911 = dma.vmem_to_hbm [thread:$0]  %s909, 128, %s906, %s871
        $region68: #{tpu_custom_call.1} parent=55 // pred_fallthru
          _
        // Predicated region
        $region69: #{tpu_custom_call.1} parent=55 // pred_check
          %p912 = pneg %p323
        $region70: #{tpu_custom_call.1} parent=55 // pred_check_branch
          %914 = sbr.rel (%p912) target = $region72
        $region71: #{tpu_custom_call.1} parent=55 // pred_region
          %s915 = smul.u32 2, %s37
          %s917 = ssub.s32 128, 128
          %918 = vsyncadd %s876, %s917
          %s919 = smul.addr %s36, 2
          %s920 = sadd.s32 %s915, %s919
          %s921 = smul.addr %s920, 64
          %s922 = scalar_lea.hbm %s11, %s921
          %s924 = sshll.u32 %s879, 4
          %s925 = int_to_ptr.vmem [resolvable:$true] %s924
          %927 = dma.vmem_to_hbm [thread:$0]  %s925, 128, %s922, %s876
        $region72: #{tpu_custom_call.1} parent=55 // pred_fallthru
          _
      $region56: #{tpu_custom_call.1} parent=5 // pred_fallthru
        _
      %p928 = scmp.le.s32.totalorder 2, %s27
      // Predicated region
      $region73: #{tpu_custom_call.1} parent=5 // pred_check
        %p929 = pneg %p928
      $region74: #{tpu_custom_call.1} parent=5 // pred_check_branch
        %931 = sbr.rel (%p929) target = $region76
      $region75: #{tpu_custom_call.1} parent=5 // pred_region
        %s932 = ssub.s32 %s27, 2
        // Predicated region
        $region77: #{tpu_custom_call.1} parent=75 // pred_check
          %p933 = pneg %p273
        $region78: #{tpu_custom_call.1} parent=75 // pred_check_branch
          %935 = sbr.rel (%p933) target = $region80
        $region79: #{tpu_custom_call.1} parent=75 // pred_region
          %s936 = sand.u32 %s258, 1
          %s937 = scalar_lea.sflag [#allocation4], %s936
          %s938 = sand.u32 %s258, 1
          %s939 = smul.addr %s938, 8
          %s940 = scalar_lea.vmem [#allocation5], %s939
          %941 = dma.done %s937, 128
        $region80: #{tpu_custom_call.1} parent=75 // pred_fallthru
          _
        // Predicated region
        $region81: #{tpu_custom_call.1} parent=75 // pred_check
          %p942 = pneg %p301
        $region82: #{tpu_custom_call.1} parent=75 // pred_check_branch
          %944 = sbr.rel (%p942) target = $region84
        $region83: #{tpu_custom_call.1} parent=75 // pred_region
          %s945 = sand.u32 %s33, 1
          %s946 = scalar_lea.sflag [#allocation7], %s945
          %s947 = sand.u32 %s286, 1
          %s948 = smul.addr %s947, 8
          %s949 = scalar_lea.vmem [#allocation6], %s948
          %950 = dma.done %s946, 128
        $region84: #{tpu_custom_call.1} parent=75 // pred_fallthru
          _
        // Predicated region
        $region85: #{tpu_custom_call.1} parent=75 // pred_check
          %p951 = pneg %p329
        $region86: #{tpu_custom_call.1} parent=75 // pred_check_branch
          %953 = sbr.rel (%p951) target = $region88
        $region87: #{tpu_custom_call.1} parent=75 // pred_region
          %s954 = sand.u32 %s33, 1
          %s955 = scalar_lea.sflag [#allocation7], %s954
          %s956 = sand.u32 %s314, 1
          %s957 = smul.addr %s956, 8
          %s958 = scalar_lea.vmem [#allocation8], %s957
          %959 = dma.done %s955, 128
        $region88: #{tpu_custom_call.1} parent=75 // pred_fallthru
          _
      $region76: #{tpu_custom_call.1} parent=5 // pred_fallthru
        _
    $region6: #{tpu_custom_call.1} parent=1 // loop_footer
      %s31 = sadd.s32 1, %s27
    $region7: #{tpu_custom_call.1} parent=1 // loop_footer_branch
      %26 = sbr.rel target = $region3
    $region8: #{tpu_custom_call.1} parent=1 // loop_exit
      _
    %960 = vsyncpa [#allocation3], 1
    %s961 = scalar_lea.sflag [#allocation3], 1
    %962 = vsyncpa %s961, 1
    %963 = vsyncpa [#allocation4], 1
    %s964 = scalar_lea.sflag [#allocation4], 1
    %965 = vsyncpa %s964, 1
    %966 = vsyncpa [#allocation7], 1
    %s967 = scalar_lea.sflag [#allocation7], 1
    %968 = vsyncpa %s967, 1

// kernel: tpu_custom_call.1
$region0: #{tpu_custom_call.1}
  #allocation0 [shape = 'u32[]', space=smem, size = 0x4, offset = 0x4, fixed_abs, tag = 'smem constant byte address 0x4 - core index']
  #allocation1 [shape = 'u32[144,128]{1,0:T(1,128)}', space=vmem, size = 0x12000, scoped, tag = 'internal scratch']
  %s0 = inlined_call_operand.hbm [shape: f32[2,4,256], index: 0, kind: input, shape index: {}]
  %s1 = inlined_call_operand.vmem [shape: f32[2,4,256], index: 1, kind: input, shape index: {}]
  %s2 = inlined_call_operand.vmem [shape: f32[4,4], index: 2, kind: input, shape index: {}]
  %s3 = inlined_call_operand.vmem [shape: f32[4,4], index: 3, kind: input, shape index: {}]
  %s4 = inlined_call_operand.vmem [shape: f32[4,1], index: 4, kind: input, shape index: {}]
  %s5 = inlined_call_operand.vmem [shape: f32[4,4], index: 5, kind: input, shape index: {}]
  %s6 = inlined_call_operand.vmem [shape: f32[4,1], index: 6, kind: input, shape index: {}]
  %s7 = inlined_call_operand.vmem [shape: f32[4,4], index: 7, kind: input, shape index: {}]
  %s8 = inlined_call_operand.vmem [shape: f32[4,1], index: 8, kind: input, shape index: {}]
  %s9 = inlined_call_operand.hbm [shape: f32[2,4,256], index: 9, kind: output, shape index: {0}]
  %s10 = inlined_call_operand.hbm [shape: f32[2,4,256], index: 10, kind: output, shape index: {1}]
  %s11 = inlined_call_operand.hbm [shape: f32[2,4,256], index: 11, kind: output, shape index: {2}]
  %12 = xla_tuple %s9, %s10, %s11
  %s13 = sld [smem:[#allocation0]]
  $region89: #{tpu_custom_call.1} parent=0
    _
  %s15 = ssub.s32 1, %s13
  %s16 = scalar_select 0, %s15, %s13
  $region1: #{tpu_custom_call.1} parent=0
    #allocation2 [shape = 'u8[8192]{0}', space=vmem, size = 0x2000, scoped, tag = 'input window, operand 0']
    #allocation3 [shape = 's32[2]{0}', space=sflag, size = 0x8, scoped, tag = 'scoped memory for tpu_custom_call.1']
    #allocation4 [shape = 's32[2]{0}', space=sflag, size = 0x8, scoped, tag = 'scoped memory for tpu_custom_call.1']
    #allocation5 [shape = 'u8[8192]{0}', space=vmem, size = 0x2000, scoped, tag = 'output window, operand 0']
    #allocation6 [shape = 'u8[8192]{0}', space=vmem, size = 0x2000, scoped, tag = 'output window, operand 1']
    #allocation7 [shape = 's32[2]{0}', space=sflag, size = 0x8, scoped, tag = 'scoped memory for tpu_custom_call.1']
    #allocation8 [shape = 'u8[8192]{0}', space=vmem, size = 0x2000, scoped, tag = 'output window, operand 2']
    %17 = vsyncpa [#allocation3], 0
    %s18 = scalar_lea.sflag [#allocation3], 1
    %19 = vsyncpa %s18, 0
    %20 = vsyncpa [#allocation4], 0
    %s21 = scalar_lea.sflag [#allocation4], 1
    %22 = vsyncpa %s21, 0
    %23 = vsyncpa [#allocation7], 0
    %s24 = scalar_lea.sflag [#allocation7], 1
    %25 = vsyncpa %s24, 0
    loop: start=0, step=1, limit=4
    $region2: #{tpu_custom_call.1} parent=1 // loop_pre_header
      _
    $region3: #{tpu_custom_call.1} parent=1 // loop_header
      %s27 = sphi 0, %s31
      %p28 = scmp.ge.s32.totalorder %s27, 4
      %s34 = sphi 0, %s46
      %s35 = sphi 0, %s42
      %s36 = sphi 0, %s34
      %s37 = sphi 0, %s35
      %s38 = sphi 0, %s36
      %s39 = sphi 0, %s37
      %s51 = sphi 0, %s53
      %s54 = sphi 0, %s51
      %s55 = sphi 0, %s54
      %s71 = sphi 0, %s55
      %s79 = sphi 0, %s81
      %s82 = sphi 0, %s79
      %s83 = sphi 0, %s82
      %s99 = sphi 0, %s83
      %s103 = sphi 0, %s103
      %s105 = sphi 0, %s103
      %s106 = sphi 0, %s105
      %s120 = sphi 0, %s106
      %s124 = sphi 0, %s124
      %s126 = sphi 0, %s124
      %s127 = sphi 0, %s126
      %s141 = sphi 0, %s127
      %s145 = sphi 0, %s145
      %s147 = sphi 0, %s145
      %s148 = sphi 0, %s147
      %s162 = sphi 0, %s148
      %s166 = sphi 0, %s166
      %s168 = sphi 0, %s166
      %s169 = sphi 0, %s168
      %s183 = sphi 0, %s169
      %s187 = sphi 0, %s187
      %s189 = sphi 0, %s187
      %s190 = sphi 0, %s189
      %s204 = sphi 0, %s190
      %s208 = sphi 0, %s208
      %s210 = sphi 0, %s208
      %s211 = sphi 0, %s210
      %s225 = sphi 0, %s211
      %s229 = sphi 0, %s229
      %s231 = sphi 0, %s229
      %s232 = sphi 0, %s231
      %s246 = sphi 0, %s232
      %s254 = sphi 0, %s256
      %s257 = sphi 0, %s254
      %s258 = sphi 0, %s257
      %s274 = sphi 0, %s258
      %s282 = sphi 0, %s284
      %s285 = sphi 0, %s282
      %s286 = sphi 0, %s285
      %s302 = sphi 0, %s286
      %s310 = sphi 0, %s312
      %s313 = sphi 0, %s310
      %s314 = sphi 0, %s313
      %s330 = sphi 0, %s314
    $region4: #{tpu_custom_call.1} parent=1 // loop_header_branch
      %30 = sbr.rel (%p28) target = $region8
    $region5: #{tpu_custom_call.1} parent=1 // loop_body
      %s32 = ssub.s32 %s27, 1
      %s33 = ssub.s32 %s27, 2
      %s40 = sadd.s32 1, %s35
      %p41 = scmp.ge.s32.totalorder %s40, 1
      %s42 = scalar_select %p41, 0, %s40
      %s43 = sadd.s32 1, %s34
      %s44 = scalar_select %p41, %s43, %s34
      %p45 = scmp.ge.s32.totalorder %s44, 2
      %s46 = scalar_select %p45, 0, %s44
      %s47 = ssub.s32 %s34, %s46
      %s48 = ssub.s32 %s35, %s42
      %s49 = sor.u32 %s47, %s48
      %p50 = scmp.eq.s32.totalorder %s49, 0
      %s52 = sadd.s32 %s51, 1
      %s53 = scalar_select %p50, %s51, %s52
      %p56 = pneg %p50
      %p57 = scmp.eq.s32.totalorder %s27, 1
      %p58 = por %p56, %p57
      %p59 = scmp.ne.s32.totalorder %s51, %s54
      %p60 = scmp.eq.s32.totalorder %s27, 0
      %p61 = por %p59, %p60
      %p62 = scmp.ne.s32.totalorder %s51, %s54
      %p63 = scmp.eq.s32.totalorder %s32, 1
      %p64 = por %p62, %p63
      %p65 = scmp.ne.s32.totalorder %s54, %s55
      %p66 = scmp.eq.s32.totalorder %s32, 0
      %p67 = por %p65, %p66
      %p68 = scmp.ne.s32.totalorder %s54, %s55
      %p69 = scmp.eq.s32.totalorder %s33, 1
      %p70 = por %p68, %p69
      %p72 = scmp.ne.s32.totalorder %s55, %s71
      %p73 = scmp.eq.s32.totalorder %s33, 0
      %p74 = por %p72, %p73
      %s75 = ssub.s32 %s34, %s46
      %s76 = ssub.s32 %s35, %s42
      %s77 = sor.u32 %s75, %s76
      %p78 = scmp.eq.s32.totalorder %s77, 0
      %s80 = sadd.s32 %s79, 1
      %s81 = scalar_select %p78, %s79, %s80
      %p84 = pneg %p78
      %p85 = scmp.eq.s32.totalorder %s27, 1
      %p86 = por %p84, %p85
      %p87 = scmp.ne.s32.totalorder %s79, %s82
      %p88 = scmp.eq.s32.totalorder %s27, 0
      %p89 = por %p87, %p88
      %p90 = scmp.ne.s32.totalorder %s79, %s82
      %p91 = scmp.eq.s32.totalorder %s32, 1
      %p92 = por %p90, %p91
      %p93 = scmp.ne.s32.totalorder %s82, %s83
      %p94 = scmp.eq.s32.totalorder %s32, 0
      %p95 = por %p93, %p94
      %p96 = scmp.ne.s32.totalorder %s82, %s83
      %p97 = scmp.eq.s32.totalorder %s33, 1
      %p98 = por %p96, %p97
      %p100 = scmp.ne.s32.totalorder %s83, %s99
      %p101 = scmp.eq.s32.totalorder %s33, 0
      %p102 = por %p100, %p101
      %s104 = sadd.s32 %s103, 1
      %p107 = scmp.eq.s32.totalorder %s27, 1
      %p108 = scmp.ne.s32.totalorder %s103, %s105
      %p109 = scmp.eq.s32.totalorder %s27, 0
      %p110 = por %p108, %p109
      %p111 = scmp.ne.s32.totalorder %s103, %s105
      %p112 = scmp.eq.s32.totalorder %s32, 1
      %p113 = por %p111, %p112
      %p114 = scmp.ne.s32.totalorder %s105, %s106
      %p115 = scmp.eq.s32.totalorder %s32, 0
      %p116 = por %p114, %p115
      %p117 = scmp.ne.s32.totalorder %s105, %s106
      %p118 = scmp.eq.s32.totalorder %s33, 1
      %p119 = por %p117, %p118
      %p121 = scmp.ne.s32.totalorder %s106, %s120
      %p122 = scmp.eq.s32.totalorder %s33, 0
      %p123 = por %p121, %p122
      %s125 = sadd.s32 %s124, 1
      %p128 = scmp.eq.s32.totalorder %s27, 1
      %p129 = scmp.ne.s32.totalorder %s124, %s126
      %p130 = scmp.eq.s32.totalorder %s27, 0
      %p131 = por %p129, %p130
      %p132 = scmp.ne.s32.totalorder %s124, %s126
      %p133 = scmp.eq.s32.totalorder %s32, 1
      %p134 = por %p132, %p133
      %p135 = scmp.ne.s32.totalorder %s126, %s127
      %p136 = scmp.eq.s32.totalorder %s32, 0
      %p137 = por %p135, %p136
      %p138 = scmp.ne.s32.totalorder %s126, %s127
      %p139 = scmp.eq.s32.totalorder %s33, 1
      %p140 = por %p138, %p139
      %p142 = scmp.ne.s32.totalorder %s127, %s141
      %p143 = scmp.eq.s32.totalorder %s33, 0
      %p144 = por %p142, %p143
      %s146 = sadd.s32 %s145, 1
      %p149 = scmp.eq.s32.totalorder %s27, 1
      %p150 = scmp.ne.s32.totalorder %s145, %s147
      %p151 = scmp.eq.s32.totalorder %s27, 0
      %p152 = por %p150, %p151
      %p153 = scmp.ne.s32.totalorder %s145, %s147
      %p154 = scmp.eq.s32.totalorder %s32, 1
      %p155 = por %p153, %p154
      %p156 = scmp.ne.s32.totalorder %s147, %s148
      %p157 = scmp.eq.s32.totalorder %s32, 0
      %p158 = por %p156, %p157
      %p159 = scmp.ne.s32.totalorder %s147, %s148
      %p160 = scmp.eq.s32.totalorder %s33, 1
      %p161 = por %p159, %p160
      %p163 = scmp.ne.s32.totalorder %s148, %s162
      %p164 = scmp.eq.s32.totalorder %s33, 0
      %p165 = por %p163, %p164
      %s167 = sadd.s32 %s166, 1
      %p170 = scmp.eq.s32.totalorder %s27, 1
      %p171 = scmp.ne.s32.totalorder %s166, %s168
      %p172 = scmp.eq.s32.totalorder %s27, 0
      %p173 = por %p171, %p172
      %p174 = scmp.ne.s32.totalorder %s166, %s168
      %p175 = scmp.eq.s32.totalorder %s32, 1
      %p176 = por %p174, %p175
      %p177 = scmp.ne.s32.totalorder %s168, %s169
      %p178 = scmp.eq.s32.totalorder %s32, 0
      %p179 = por %p177, %p178
      %p180 = scmp.ne.s32.totalorder %s168, %s169
      %p181 = scmp.eq.s32.totalorder %s33, 1
      %p182 = por %p180, %p181
      %p184 = scmp.ne.s32.totalorder %s169, %s183
      %p185 = scmp.eq.s32.totalorder %s33, 0
      %p186 = por %p184, %p185
      %s188 = sadd.s32 %s187, 1
      %p191 = scmp.eq.s32.totalorder %s27, 1
      %p192 = scmp.ne.s32.totalorder %s187, %s189
      %p193 = scmp.eq.s32.totalorder %s27, 0
      %p194 = por %p192, %p193
      %p195 = scmp.ne.s32.totalorder %s187, %s189
      %p196 = scmp.eq.s32.totalorder %s32, 1
      %p197 = por %p195, %p196
      %p198 = scmp.ne.s32.totalorder %s189, %s190
      %p199 = scmp.eq.s32.totalorder %s32, 0
      %p200 = por %p198, %p199
      %p201 = scmp.ne.s32.totalorder %s189, %s190
      %p202 = scmp.eq.s32.totalorder %s33, 1
      %p203 = por %p201, %p202
      %p205 = scmp.ne.s32.totalorder %s190, %s204
      %p206 = scmp.eq.s32.totalorder %s33, 0
      %p207 = por %p205, %p206
      %s209 = sadd.s32 %s208, 1
      %p212 = scmp.eq.s32.totalorder %s27, 1
      %p213 = scmp.ne.s32.totalorder %s208, %s210
      %p214 = scmp.eq.s32.totalorder %s27, 0
      %p215 = por %p213, %p214
      %p216 = scmp.ne.s32.totalorder %s208, %s210
      %p217 = scmp.eq.s32.totalorder %s32, 1
      %p218 = por %p216, %p217
      %p219 = scmp.ne.s32.totalorder %s210, %s211
      %p220 = scmp.eq.s32.totalorder %s32, 0
      %p221 = por %p219, %p220
      %p222 = scmp.ne.s32.totalorder %s210, %s211
      %p223 = scmp.eq.s32.totalorder %s33, 1
      %p224 = por %p222, %p223
      %p226 = scmp.ne.s32.totalorder %s211, %s225
      %p227 = scmp.eq.s32.totalorder %s33, 0
      %p228 = por %p226, %p227
      %s230 = sadd.s32 %s229, 1
      %p233 = scmp.eq.s32.totalorder %s27, 1
      %p234 = scmp.ne.s32.totalorder %s229, %s231
      %p235 = scmp.eq.s32.totalorder %s27, 0
      %p236 = por %p234, %p235
      %p237 = scmp.ne.s32.totalorder %s229, %s231
      %p238 = scmp.eq.s32.totalorder %s32, 1
      %p239 = por %p237, %p238
      %p240 = scmp.ne.s32.totalorder %s231, %s232
      %p241 = scmp.eq.s32.totalorder %s32, 0
      %p242 = por %p240, %p241
      %p243 = scmp.ne.s32.totalorder %s231, %s232
      %p244 = scmp.eq.s32.totalorder %s33, 1
      %p245 = por %p243, %p244
      %p247 = scmp.ne.s32.totalorder %s232, %s246
      %p248 = scmp.eq.s32.totalorder %s33, 0
      %p249 = por %p247, %p248
      %s250 = ssub.s32 %s34, %s46
      %s251 = ssub.s32 %s35, %s42
      %s252 = sor.u32 %s250, %s251
      %p253 = scmp.eq.s32.totalorder %s252, 0
      %s255 = sadd.s32 %s254, 1
      %s256 = scalar_select %p253, %s254, %s255
      %p259 = pneg %p253
      %p260 = scmp.eq.s32.totalorder %s27, 1
      %p261 = por %p259, %p260
      %p262 = scmp.ne.s32.totalorder %s254, %s257
      %p263 = scmp.eq.s32.totalorder %s27, 0
      %p264 = por %p262, %p263
      %p265 = scmp.ne.s32.totalorder %s254, %s257
      %p266 = scmp.eq.s32.totalorder %s32, 1
      %p267 = por %p265, %p266
      %p268 = scmp.ne.s32.totalorder %s257, %s258
      %p269 = scmp.eq.s32.totalorder %s32, 0
      %p270 = por %p268, %p269
      %p271 = scmp.ne.s32.totalorder %s257, %s258
      %p272 = scmp.eq.s32.totalorder %s33, 1
      %p273 = por %p271, %p272
      %p275 = scmp.ne.s32.totalorder %s258, %s274
      %p276 = scmp.eq.s32.totalorder %s33, 0
      %p277 = por %p275, %p276
      %s278 = ssub.s32 %s34, %s46
      %s279 = ssub.s32 %s35, %s42
      %s280 = sor.u32 %s278, %s279
      %p281 = scmp.eq.s32.totalorder %s280, 0
      %s283 = sadd.s32 %s282, 1
      %s284 = scalar_select %p281, %s282, %s283
      %p287 = pneg %p281
      %p288 = scmp.eq.s32.totalorder %s27, 1
      %p289 = por %p287, %p288
      %p290 = scmp.ne.s32.totalorder %s282, %s285
      %p291 = scmp.eq.s32.totalorder %s27, 0
      %p292 = por %p290, %p291
      %p293 = scmp.ne.s32.totalorder %s282, %s285
      %p294 = scmp.eq.s32.totalorder %s32, 1
      %p295 = por %p293, %p294
      %p296 = scmp.ne.s32.totalorder %s285, %s286
      %p297 = scmp.eq.s32.totalorder %s32, 0
      %p298 = por %p296, %p297
      %p299 = scmp.ne.s32.totalorder %s285, %s286
      %p300 = scmp.eq.s32.totalorder %s33, 1
      %p301 = por %p299, %p300
      %p303 = scmp.ne.s32.totalorder %s286, %s302
      %p304 = scmp.eq.s32.totalorder %s33, 0
      %p305 = por %p303, %p304
      %s306 = ssub.s32 %s34, %s46
      %s307 = ssub.s32 %s35, %s42
      %s308 = sor.u32 %s306, %s307
      %p309 = scmp.eq.s32.totalorder %s308, 0
      %s311 = sadd.s32 %s310, 1
      %s312 = scalar_select %p309, %s310, %s311
      %p315 = pneg %p309
      %p316 = scmp.eq.s32.totalorder %s27, 1
      %p317 = por %p315, %p316
      %p318 = scmp.ne.s32.totalorder %s310, %s313
      %p319 = scmp.eq.s32.totalorder %s27, 0
      %p320 = por %p318, %p319
      %p321 = scmp.ne.s32.totalorder %s310, %s313
      %p322 = scmp.eq.s32.totalorder %s32, 1
      %p323 = por %p321, %p322
      %p324 = scmp.ne.s32.totalorder %s313, %s314
      %p325 = scmp.eq.s32.totalorder %s32, 0
      %p326 = por %p324, %p325
      %p327 = scmp.ne.s32.totalorder %s313, %s314
      %p328 = scmp.eq.s32.totalorder %s33, 1
      %p329 = por %p327, %p328
      %p331 = scmp.ne.s32.totalorder %s314, %s330
      %p332 = scmp.eq.s32.totalorder %s33, 0
      %p333 = por %p331, %p332
      %p334 = scmp.le.s32.totalorder 1, %s27
      %p335 = scmp.lt.s32.totalorder %s27, 3
      %p336 = pnand %p334, %p335
      %p337 = pneg %p336
      // Predicated region
      $region9: #{tpu_custom_call.1} parent=5 // pred_check
        _
      $region10: #{tpu_custom_call.1} parent=5 // pred_check_branch
        %339 = sbr.rel (%p336) target = $region12
      $region11: #{tpu_custom_call.1} parent=5 // pred_region
        %s340 = ssub.s32 %s27, 1
        // Predicated region
        $region13: #{tpu_custom_call.1} parent=11 // pred_check
          %p341 = pneg %p116
        $region14: #{tpu_custom_call.1} parent=11 // pred_check_branch
          %343 = sbr.rel (%p341) target = $region16
        $region15: #{tpu_custom_call.1} parent=11 // pred_region
          _
        $region16: #{tpu_custom_call.1} parent=11 // pred_fallthru
          _
        // Predicated region
        $region17: #{tpu_custom_call.1} parent=11 // pred_check
          %p344 = pneg %p137
        $region18: #{tpu_custom_call.1} parent=11 // pred_check_branch
          %346 = sbr.rel (%p344) target = $region20
        $region19: #{tpu_custom_call.1} parent=11 // pred_region
          _
        $region20: #{tpu_custom_call.1} parent=11 // pred_fallthru
          _
        // Predicated region
        $region21: #{tpu_custom_call.1} parent=11 // pred_check
          %p347 = pneg %p158
        $region22: #{tpu_custom_call.1} parent=11 // pred_check_branch
          %349 = sbr.rel (%p347) target = $region24
        $region23: #{tpu_custom_call.1} parent=11 // pred_region
          _
        $region24: #{tpu_custom_call.1} parent=11 // pred_fallthru
          _
        // Predicated region
        $region25: #{tpu_custom_call.1} parent=11 // pred_check
          %p350 = pneg %p179
        $region26: #{tpu_custom_call.1} parent=11 // pred_check_branch
          %352 = sbr.rel (%p350) target = $region28
        $region27: #{tpu_custom_call.1} parent=11 // pred_region
          _
        $region28: #{tpu_custom_call.1} parent=11 // pred_fallthru
          _
        // Predicated region
        $region29: #{tpu_custom_call.1} parent=11 // pred_check
          %p353 = pneg %p200
        $region30: #{tpu_custom_call.1} parent=11 // pred_check_branch
          %355 = sbr.rel (%p353) target = $region32
        $region31: #{tpu_custom_call.1} parent=11 // pred_region
          _
        $region32: #{tpu_custom_call.1} parent=11 // pred_fallthru
          _
        // Predicated region
        $region33: #{tpu_custom_call.1} parent=11 // pred_check
          %p356 = pneg %p221
        $region34: #{tpu_custom_call.1} parent=11 // pred_check_branch
          %358 = sbr.rel (%p356) target = $region36
        $region35: #{tpu_custom_call.1} parent=11 // pred_region
          _
        $region36: #{tpu_custom_call.1} parent=11 // pred_fallthru
          _
        // Predicated region
        $region37: #{tpu_custom_call.1} parent=11 // pred_check
          %p359 = pneg %p242
        $region38: #{tpu_custom_call.1} parent=11 // pred_check_branch
          %361 = sbr.rel (%p359) target = $region40
        $region39: #{tpu_custom_call.1} parent=11 // pred_region
          _
        $region40: #{tpu_custom_call.1} parent=11 // pred_fallthru
          _
      $region12: #{tpu_custom_call.1} parent=5 // pred_fallthru
        _
      %p362 = scmp.lt.s32.totalorder %s27, 2
      // Predicated region
      $region41: #{tpu_custom_call.1} parent=5 // pred_check
        %p363 = pneg %p362
      $region42: #{tpu_custom_call.1} parent=5 // pred_check_branch
        %365 = sbr.rel (%p363) target = $region44
      $region43: #{tpu_custom_call.1} parent=5 // pred_region
        // Predicated region
        $region45: #{tpu_custom_call.1} parent=43 // pred_check
          %p366 = pneg %p61
        $region46: #{tpu_custom_call.1} parent=43 // pred_check_branch
          %368 = sbr.rel (%p366) target = $region48
        $region47: #{tpu_custom_call.1} parent=43 // pred_region
          %s369 = sand.u32 %s51, 1
          %s370 = scalar_lea.sflag [#allocation3], %s369
          %s371 = sand.u32 %s51, 1
          %s372 = smul.addr %s371, 8
          %s373 = scalar_lea.vmem [#allocation2], %s372
          %s374 = smul.u32 2, %s35
          %s376 = ssub.s32 128, 128
          %377 = vsyncadd %s370, %s376
          %s378 = smul.addr %s34, 2
          %s379 = sadd.s32 %s374, %s378
          %s380 = smul.addr %s379, 64
          %s381 = scalar_lea.hbm %s0, %s380
          %s383 = sshll.u32 %s373, 4
          %s384 = int_to_ptr.vmem [resolvable:$true] %s383
          %386 = dma.hbm_to_vmem [thread:$0]  %s381, 128, %s384, %s370
        $region48: #{tpu_custom_call.1} parent=43 // pred_fallthru
          _
        // Predicated region
        $region49: #{tpu_custom_call.1} parent=43 // pred_check
          %p387 = pneg %p89
        $region50: #{tpu_custom_call.1} parent=43 // pred_check_branch
          %389 = sbr.rel (%p387) target = $region52
        $region51: #{tpu_custom_call.1} parent=43 // pred_region
          %s390 = smul.u32 2, %s35
          %p391 = scmp.lt.s32.totalorder %s34, 1
          %s392 = scalar_select %p391, %s34, 1
          %p393 = scmp.lt.s32.totalorder %s390, 1
          %s394 = scalar_select %p393, %s390, 1
          %s395 = smul.addr %s392, 2
          %s396 = sadd.s32 %s394, %s395
          %s397 = smul.addr %s396, 4
          %s398 = scalar_lea.vmem %s1, %s397
          %s399 = smul.u32 2, %s35
        $region52: #{tpu_custom_call.1} parent=43 // pred_fallthru
          _
      $region44: #{tpu_custom_call.1} parent=5 // pred_fallthru
        _
      %p400 = scmp.le.s32.totalorder 1, %s27
      %p401 = scmp.lt.s32.totalorder %s27, 3
      %p402 = pnand %p400, %p401
      %p403 = pneg %p402
      // Predicated region
      $region53: #{tpu_custom_call.1} parent=5 // pred_check
        _
      $region54: #{tpu_custom_call.1} parent=5 // pred_check_branch
        %405 = sbr.rel (%p402) target = $region56
      $region55: #{tpu_custom_call.1} parent=5 // pred_region
        %s406 = ssub.s32 %s27, 1
        %s407 = sand.u32 %s54, 1
        %s408 = scalar_lea.sflag [#allocation3], %s407
        %s409 = sand.u32 %s54, 1
        %s410 = smul.addr %s409, 8
        %s411 = scalar_lea.vmem [#allocation2], %s410
        // Predicated region
        $region57: #{tpu_custom_call.1} parent=55 // pred_check
          %p412 = pneg %p67
        $region58: #{tpu_custom_call.1} parent=55 // pred_check_branch
          %414 = sbr.rel (%p412) target = $region60
        $region59: #{tpu_custom_call.1} parent=55 // pred_region
          %415 = dma.done %s408, 128
        $region60: #{tpu_custom_call.1} parent=55 // pred_fallthru
          _
        %s416 = sand.u32 %s54, 1
        %s417 = scalar_lea.sflag [#allocation3], %s416
        %s418 = sand.u32 %s54, 1
        %s419 = smul.addr %s418, 8
        %s420 = scalar_lea.vmem [#allocation2], %s419
        %p421 = pneg %p67
        %p422 = pneg %p64
        %s423 = smul.u32 2, %s37
        %p424 = scmp.lt.s32.totalorder %s36, 1
        %s425 = scalar_select %p424, %s36, 1
        %p426 = scmp.lt.s32.totalorder %s423, 1
        %s427 = scalar_select %p426, %s423, 1
        %s428 = smul.addr %s425, 2
        %s429 = sadd.s32 %s427, %s428
        %s430 = smul.addr %s429, 4
        %s431 = scalar_lea.vmem %s1, %s430
        %p432 = pneg %p95
        %p433 = pneg %p92
        %p434 = pneg %p116
        %p435 = pneg %p113
        %p436 = pneg %p137
        %p437 = pneg %p134
        %p438 = pneg %p158
        %p439 = pneg %p155
        %p440 = pneg %p179
        %p441 = pneg %p176
        %p442 = pneg %p200
        %p443 = pneg %p197
        %p444 = pneg %p221
        %p445 = pneg %p218
        %p446 = pneg %p242
        %p447 = pneg %p239
        %p448 = pneg %p270
        %p449 = pneg %p267
        %s450 = sand.u32 %s257, 1
        %s451 = scalar_lea.sflag [#allocation4], %s450
        %s452 = sand.u32 %s257, 1
        %s453 = smul.addr %s452, 8
        %s454 = scalar_lea.vmem [#allocation5], %s453
        %p455 = pneg %p298
        %p456 = pneg %p295
        %s457 = sand.u32 %s32, 1
        %s458 = scalar_lea.sflag [#allocation7], %s457
        %s459 = sand.u32 %s285, 1
        %s460 = smul.addr %s459, 8
        %s461 = scalar_lea.vmem [#allocation6], %s460
        %p462 = pneg %p326
        %p463 = pneg %p323
        %s464 = sand.u32 %s32, 1
        %s465 = scalar_lea.sflag [#allocation7], %s464
        %s466 = sand.u32 %s313, 1
        %s467 = smul.addr %s466, 8
        %s468 = scalar_lea.vmem [#allocation8], %s467
        %s469 = smul.u32 2, %s37
        %s470 = smul.u32 2, %s37
        %p471 = scmp.lt.s32.totalorder %s36, 1
        %s472 = scalar_select %p471, %s36, 1
        %p473 = scmp.lt.s32.totalorder %s470, 1
        %s474 = scalar_select %p473, %s470, 1
        %s475 = smul.addr %s472, 2
        %s476 = sadd.s32 %s474, %s475
        %s477 = smul.addr %s476, 4
        %s478 = scalar_lea.vmem %s1, %s477
        %s479 = smul.u32 2, %s37
        %s480 = smul.u32 2, %s37
        %s481 = smul.u32 2, %s37
        %s482 = smul.u32 2, %s37
        %v483 = vld [vmem:[%s411] sm:$0xff]
        %v484 = vld [vmem:[%s478] sm:$0xff]
        %v485 = vld [vmem:[%s2] sm:$0xf]
        %v486 = vld [vmem:[%s3] sm:$0xf]
        %v488 = vcombine.high %v484, %v484
        %vm489 = vcmask 31744
        %v491 = vsel %vm489, %v486, 0
        %vm493 = vcmask 1043456
        %v494 = vsel %vm493, %v484, 0
        %v496 = vsel %vm493, %v488, 0
        %498 = vmatprep.subr.mxu0 %v496
        %499 = vmatpush1.msra.mxu0 %v494
        %500 = vmatprep.subr.mxu0 0.0
        %501 = vmatpush1.msra.mxu0 0.0
        %502 = vmatprep.subr.mxu0 0.0
        %503 = vmatpush1.msra.mxu0 0.0
        %504 = vmatprep.subr.mxu0 0.0
        %505 = vmatpush1.msra.mxu0 0.0
        %506 = vmatprep.subr.mxu0 0.0
        %507 = vmatpush1.msra.mxu0 0.0
        %508 = vmatprep.subr.mxu0 0.0
        %509 = vmatpush1.msra.mxu0 0.0
        %510 = vmatprep.subr.mxu0 0.0
        %511 = vmatpush1.msra.mxu0 0.0
        %512 = vmatprep.subr.mxu0 0.0
        %513 = vmatpush1.msra.mxu0 0.0
        %514 = vmatprep.subr.mxu0 0.0
        %515 = vmatpush1.msra.mxu0 0.0
        %516 = vmatprep.subr.mxu0 0.0
        %517 = vmatpush1.msra.mxu0 0.0
        %518 = vmatprep.subr.mxu0 0.0
        %519 = vmatpush1.msra.mxu0 0.0
        %520 = vmatprep.subr.mxu0 0.0
        %521 = vmatpush1.msra.mxu0 0.0
        %522 = vmatprep.subr.mxu0 0.0
        %523 = vmatpush1.msra.mxu0 0.0
        %524 = vmatprep.subr.mxu0 0.0
        %525 = vmatpush1.msra.mxu0 0.0
        %526 = vmatprep.subr.mxu0 0.0
        %527 = vmatpush1.msra.mxu0 0.0
        %528 = vmatprep.subr.mxu0 0.0
        %529 = vmatpush1.msra.mxu0 0.0
        %530 = vmatprep.subr.mxu0 0.0
        %531 = vmatpush1.msra.mxu0 0.0
        %532 = vmatprep.subr.mxu0 0.0
        %533 = vmatpush1.msra.mxu0 0.0
        %534 = vmatprep.subr.mxu0 0.0
        %535 = vmatpush1.msra.mxu0 0.0
        %536 = vmatprep.subr.mxu0 0.0
        %537 = vmatpush1.msra.mxu0 0.0
        %538 = vmatprep.subr.mxu0 0.0
        %539 = vmatpush1.msra.mxu0 0.0
        %540 = vmatprep.subr.mxu0 0.0
        %541 = vmatpush1.msra.mxu0 0.0
        %542 = vmatprep.subr.mxu0 0.0
        %543 = vmatpush1.msra.mxu0 0.0
        %544 = vmatprep.subr.mxu0 0.0
        %545 = vmatpush1.msra.mxu0 0.0
        %546 = vmatprep.subr.mxu0 0.0
        %547 = vmatpush1.msra.mxu0 0.0
        %548 = vmatprep.subr.mxu0 0.0
        %549 = vmatpush1.msra.mxu0 0.0
        %550 = vmatprep.subr.mxu0 0.0
        %551 = vmatpush1.msra.mxu0 0.0
        %552 = vmatprep.subr.mxu0 0.0
        %553 = vmatpush1.msra.mxu0 0.0
        %554 = vmatprep.subr.mxu0 0.0
        %555 = vmatpush1.msra.mxu0 0.0
        %556 = vmatprep.subr.mxu0 0.0
        %557 = vmatpush1.msra.mxu0 0.0
        %558 = vmatprep.subr.mxu0 0.0
        %559 = vmatpush1.msra.mxu0 0.0
        %560 = vmatprep.subr.mxu0 0.0
        %561 = vmatpush1.msra.mxu0 0.0
        %562 = vmatprep.mubr.f32.mxu0 0.0
        %563 = vmatmul.mubr.f32.gmra.mrb[0].mxu0 %v491
        %v564 = vpop.f32.mrb[0].mxu0
        %v565 = vadd.f32 0.0, %v564
        %v566 = vpop.f32.mrb[0].mxu0
        %v567 = vadd.f32 0.0, %v566
        %568 = vdwg.mxu0
        %v570 = vcombine.high %v483, %v483
        %v572 = vsel %vm489, %v485, 0
        %v574 = vsel %vm493, %v483, 0
        %v576 = vsel %vm493, %v570, 0
        %578 = vmatprep.subr.mxu0 %v576
        %579 = vmatpush1.msra.mxu0 %v574
        %580 = vmatprep.subr.mxu0 0.0
        %581 = vmatpush1.msra.mxu0 0.0
        %582 = vmatprep.subr.mxu0 0.0
        %583 = vmatpush1.msra.mxu0 0.0
        %584 = vmatprep.subr.mxu0 0.0
        %585 = vmatpush1.msra.mxu0 0.0
        %586 = vmatprep.subr.mxu0 0.0
        %587 = vmatpush1.msra.mxu0 0.0
        %588 = vmatprep.subr.mxu0 0.0
        %589 = vmatpush1.msra.mxu0 0.0
        %590 = vmatprep.subr.mxu0 0.0
        %591 = vmatpush1.msra.mxu0 0.0
        %592 = vmatprep.subr.mxu0 0.0
        %593 = vmatpush1.msra.mxu0 0.0
        %594 = vmatprep.subr.mxu0 0.0
        %595 = vmatpush1.msra.mxu0 0.0
        %596 = vmatprep.subr.mxu0 0.0
        %597 = vmatpush1.msra.mxu0 0.0
        %598 = vmatprep.subr.mxu0 0.0
        %599 = vmatpush1.msra.mxu0 0.0
        %600 = vmatprep.subr.mxu0 0.0
        %601 = vmatpush1.msra.mxu0 0.0
        %602 = vmatprep.subr.mxu0 0.0
        %603 = vmatpush1.msra.mxu0 0.0
        %604 = vmatprep.subr.mxu0 0.0
        %605 = vmatpush1.msra.mxu0 0.0
        %606 = vmatprep.subr.mxu0 0.0
        %607 = vmatpush1.msra.mxu0 0.0
        %608 = vmatprep.subr.mxu0 0.0
        %609 = vmatpush1.msra.mxu0 0.0
        %610 = vmatprep.subr.mxu0 0.0
        %611 = vmatpush1.msra.mxu0 0.0
        %612 = vmatprep.subr.mxu0 0.0
        %613 = vmatpush1.msra.mxu0 0.0
        %614 = vmatprep.subr.mxu0 0.0
        %615 = vmatpush1.msra.mxu0 0.0
        %616 = vmatprep.subr.mxu0 0.0
        %617 = vmatpush1.msra.mxu0 0.0
        %618 = vmatprep.subr.mxu0 0.0
        %619 = vmatpush1.msra.mxu0 0.0
        %620 = vmatprep.subr.mxu0 0.0
        %621 = vmatpush1.msra.mxu0 0.0
        %622 = vmatprep.subr.mxu0 0.0
        %623 = vmatpush1.msra.mxu0 0.0
        %624 = vmatprep.subr.mxu0 0.0
        %625 = vmatpush1.msra.mxu0 0.0
        %626 = vmatprep.subr.mxu0 0.0
        %627 = vmatpush1.msra.mxu0 0.0
        %628 = vmatprep.subr.mxu0 0.0
        %629 = vmatpush1.msra.mxu0 0.0
        %630 = vmatprep.subr.mxu0 0.0
        %631 = vmatpush1.msra.mxu0 0.0
        %632 = vmatprep.subr.mxu0 0.0
        %633 = vmatpush1.msra.mxu0 0.0
        %634 = vmatprep.subr.mxu0 0.0
        %635 = vmatpush1.msra.mxu0 0.0
        %636 = vmatprep.subr.mxu0 0.0
        %637 = vmatpush1.msra.mxu0 0.0
        %638 = vmatprep.subr.mxu0 0.0
        %639 = vmatpush1.msra.mxu0 0.0
        %640 = vmatprep.subr.mxu0 0.0
        %641 = vmatpush1.msra.mxu0 0.0
        %642 = vmatprep.mubr.f32.mxu0 0.0
        %643 = vmatmul.mubr.f32.gmra.mrb[0].mxu0 %v572
        %v644 = vpop.f32.mrb[0].mxu0
        %v645 = vadd.f32 %v565, %v644
        %v646 = vpop.f32.mrb[0].mxu0
        %v647 = vadd.f32 %v567, %v646
        %648 = vdwg.mxu0
        %v649 = vld [vmem:[%s4] sm:$0xf]
        %651 = vset.pattern.permute.xlu0 0
        %652 = vperm.xlu0 %651, %v649
        %v653 = vpop.permute.xlu0 %652
        %v655 = vadd.f32 %v645, %v653
        %v656 = vadd.f32 %v647, %v653
        %v657 = vmax.f32 %v655, 0.0
        %v658 = vmax.f32 %v656, 0.0
        %v659 = vld [vmem:[%s5] sm:$0xf]
        %v660 = vld [vmem:[%s6] sm:$0xf]
        %662 = vset.pattern.permute.xlu0 0
        %663 = vperm.xlu0 %662, %v660
        %v664 = vpop.permute.xlu0 %663
        %v667 = vsel %vm489, %v659, 0
        %v670 = vsel %vm493, %v657, 0
        %v673 = vsel %vm493, %v658, 0
        %675 = vmatprep.subr.mxu0 %v673
        %676 = vmatpush1.msra.mxu0 %v670
        %677 = vmatprep.subr.mxu0 0.0
        %678 = vmatpush1.msra.mxu0 0.0
        %679 = vmatprep.subr.mxu0 0.0
        %680 = vmatpush1.msra.mxu0 0.0
        %681 = vmatprep.subr.mxu0 0.0
        %682 = vmatpush1.msra.mxu0 0.0
        %683 = vmatprep.subr.mxu0 0.0
        %684 = vmatpush1.msra.mxu0 0.0
        %685 = vmatprep.subr.mxu0 0.0
        %686 = vmatpush1.msra.mxu0 0.0
        %687 = vmatprep.subr.mxu0 0.0
        %688 = vmatpush1.msra.mxu0 0.0
        %689 = vmatprep.subr.mxu0 0.0
        %690 = vmatpush1.msra.mxu0 0.0
        %691 = vmatprep.subr.mxu0 0.0
        %692 = vmatpush1.msra.mxu0 0.0
        %693 = vmatprep.subr.mxu0 0.0
        %694 = vmatpush1.msra.mxu0 0.0
        %695 = vmatprep.subr.mxu0 0.0
        %696 = vmatpush1.msra.mxu0 0.0
        %697 = vmatprep.subr.mxu0 0.0
        %698 = vmatpush1.msra.mxu0 0.0
        %699 = vmatprep.subr.mxu0 0.0
        %700 = vmatpush1.msra.mxu0 0.0
        %701 = vmatprep.subr.mxu0 0.0
        %702 = vmatpush1.msra.mxu0 0.0
        %703 = vmatprep.subr.mxu0 0.0
        %704 = vmatpush1.msra.mxu0 0.0
        %705 = vmatprep.subr.mxu0 0.0
        %706 = vmatpush1.msra.mxu0 0.0
        %707 = vmatprep.subr.mxu0 0.0
        %708 = vmatpush1.msra.mxu0 0.0
        %709 = vmatprep.subr.mxu0 0.0
        %710 = vmatpush1.msra.mxu0 0.0
        %711 = vmatprep.subr.mxu0 0.0
        %712 = vmatpush1.msra.mxu0 0.0
        %713 = vmatprep.subr.mxu0 0.0
        %714 = vmatpush1.msra.mxu0 0.0
        %715 = vmatprep.subr.mxu0 0.0
        %716 = vmatpush1.msra.mxu0 0.0
        %717 = vmatprep.subr.mxu0 0.0
        %718 = vmatpush1.msra.mxu0 0.0
        %719 = vmatprep.subr.mxu0 0.0
        %720 = vmatpush1.msra.mxu0 0.0
        %721 = vmatprep.subr.mxu0 0.0
        %722 = vmatpush1.msra.mxu0 0.0
        %723 = vmatprep.subr.mxu0 0.0
        %724 = vmatpush1.msra.mxu0 0.0
        %725 = vmatprep.subr.mxu0 0.0
        %726 = vmatpush1.msra.mxu0 0.0
        %727 = vmatprep.subr.mxu0 0.0
        %728 = vmatpush1.msra.mxu0 0.0
        %729 = vmatprep.subr.mxu0 0.0
        %730 = vmatpush1.msra.mxu0 0.0
        %731 = vmatprep.subr.mxu0 0.0
        %732 = vmatpush1.msra.mxu0 0.0
        %733 = vmatprep.subr.mxu0 0.0
        %734 = vmatpush1.msra.mxu0 0.0
        %735 = vmatprep.subr.mxu0 0.0
        %736 = vmatpush1.msra.mxu0 0.0
        %737 = vmatprep.subr.mxu0 0.0
        %738 = vmatpush1.msra.mxu0 0.0
        %739 = vmatprep.mubr.f32.mxu0 0.0
        %740 = vmatmul.mubr.f32.gmra.mrb[0].mxu0 %v667
        %v741 = vpop.f32.mrb[0].mxu0
        %v742 = vadd.f32 %v664, %v741
        %v743 = vpop.f32.mrb[0].mxu0
        %v744 = vadd.f32 %v664, %v743
        %745 = vdwg.mxu0
        %v746 = vxor.u32 %v742, 2147483648
        %v747 = vxor.u32 %v744, 2147483648
        %v748 = vmul.f32 %v746, 1.442695
        %v749 = vpow.pop %v748
        %v750 = vmul.f32 %v747, 1.442695
        %v751 = vpow.pop %v750
        %v752 = vadd.f32 %v749, 1.0
        %v753 = vadd.f32 %v751, 1.0
        %v754 = vrcp.pop %v752
        %v755 = vmul.f32 1.0, %v754
        %v756 = vrcp.pop %v753
        %v757 = vmul.f32 1.0, %v756
        %v758 = vld [vmem:[%s7] sm:$0xf]
        %v759 = vld [vmem:[%s8] sm:$0xf]
        %761 = vset.pattern.permute.xlu0 0
        %762 = vperm.xlu0 %761, %v759
        %v763 = vpop.permute.xlu0 %762
        %v766 = vsel %vm489, %v758, 0
        %768 = vmatprep.subr.mxu0 %v673
        %769 = vmatpush1.msra.mxu0 %v670
        %770 = vmatprep.subr.mxu0 0.0
        %771 = vmatpush1.msra.mxu0 0.0
        %772 = vmatprep.subr.mxu0 0.0
        %773 = vmatpush1.msra.mxu0 0.0
        %774 = vmatprep.subr.mxu0 0.0
        %775 = vmatpush1.msra.mxu0 0.0
        %776 = vmatprep.subr.mxu0 0.0
        %777 = vmatpush1.msra.mxu0 0.0
        %778 = vmatprep.subr.mxu0 0.0
        %779 = vmatpush1.msra.mxu0 0.0
        %780 = vmatprep.subr.mxu0 0.0
        %781 = vmatpush1.msra.mxu0 0.0
        %782 = vmatprep.subr.mxu0 0.0
        %783 = vmatpush1.msra.mxu0 0.0
        %784 = vmatprep.subr.mxu0 0.0
        %785 = vmatpush1.msra.mxu0 0.0
        %786 = vmatprep.subr.mxu0 0.0
        %787 = vmatpush1.msra.mxu0 0.0
        %788 = vmatprep.subr.mxu0 0.0
        %789 = vmatpush1.msra.mxu0 0.0
        %790 = vmatprep.subr.mxu0 0.0
        %791 = vmatpush1.msra.mxu0 0.0
        %792 = vmatprep.subr.mxu0 0.0
        %793 = vmatpush1.msra.mxu0 0.0
        %794 = vmatprep.subr.mxu0 0.0
        %795 = vmatpush1.msra.mxu0 0.0
        %796 = vmatprep.subr.mxu0 0.0
        %797 = vmatpush1.msra.mxu0 0.0
        %798 = vmatprep.subr.mxu0 0.0
        %799 = vmatpush1.msra.mxu0 0.0
        %800 = vmatprep.subr.mxu0 0.0
        %801 = vmatpush1.msra.mxu0 0.0
        %802 = vmatprep.subr.mxu0 0.0
        %803 = vmatpush1.msra.mxu0 0.0
        %804 = vmatprep.subr.mxu0 0.0
        %805 = vmatpush1.msra.mxu0 0.0
        %806 = vmatprep.subr.mxu0 0.0
        %807 = vmatpush1.msra.mxu0 0.0
        %808 = vmatprep.subr.mxu0 0.0
        %809 = vmatpush1.msra.mxu0 0.0
        %810 = vmatprep.subr.mxu0 0.0
        %811 = vmatpush1.msra.mxu0 0.0
        %812 = vmatprep.subr.mxu0 0.0
        %813 = vmatpush1.msra.mxu0 0.0
        %814 = vmatprep.subr.mxu0 0.0
        %815 = vmatpush1.msra.mxu0 0.0
        %816 = vmatprep.subr.mxu0 0.0
        %817 = vmatpush1.msra.mxu0 0.0
        %818 = vmatprep.subr.mxu0 0.0
        %819 = vmatpush1.msra.mxu0 0.0
        %820 = vmatprep.subr.mxu0 0.0
        %821 = vmatpush1.msra.mxu0 0.0
        %822 = vmatprep.subr.mxu0 0.0
        %823 = vmatpush1.msra.mxu0 0.0
        %824 = vmatprep.subr.mxu0 0.0
        %825 = vmatpush1.msra.mxu0 0.0
        %826 = vmatprep.subr.mxu0 0.0
        %827 = vmatpush1.msra.mxu0 0.0
        %828 = vmatprep.subr.mxu0 0.0
        %829 = vmatpush1.msra.mxu0 0.0
        %830 = vmatprep.subr.mxu0 0.0
        %831 = vmatpush1.msra.mxu0 0.0
        %832 = vmatprep.mubr.f32.mxu0 0.0
        %833 = vmatmul.mubr.f32.gmra.mrb[0].mxu0 %v766
        %v834 = vpop.f32.mrb[0].mxu0
        %v835 = vadd.f32 %v763, %v834
        %v836 = vpop.f32.mrb[0].mxu0
        %v837 = vadd.f32 %v763, %v836
        %838 = vdwg.mxu0
        %v839 = vxor.u32 %v835, 2147483648
        %v840 = vxor.u32 %v837, 2147483648
        %v841 = vmul.f32 %v839, 1.442695
        %v842 = vpow.pop %v841
        %v843 = vmul.f32 %v840, 1.442695
        %v844 = vpow.pop %v843
        %v845 = vadd.f32 %v842, 1.0
        %v846 = vadd.f32 %v844, 1.0
        %v847 = vrcp.pop %v845
        %v848 = vmul.f32 1.0, %v847
        %v849 = vrcp.pop %v846
        %v850 = vmul.f32 1.0, %v849
        %v853 = vcombine.low %v755, %v757
        %v855 = vmul.f32 %v483, %v853
        %v858 = vcombine.low %v848, %v850
        %v860 = vmul.f32 %v484, %v858
        %v861 = vadd.f32 %v855, %v860
        %862 = vst [vmem:[%s454] sm:$0xff] %v861
        %863 = vst [vmem:[%s461] sm:$0xff] %v855
        %864 = vst [vmem:[%s468] sm:$0xff] %v860
        %s865 = sand.u32 %s257, 1
        %s866 = scalar_lea.sflag [#allocation4], %s865
        %s867 = sand.u32 %s257, 1
        %s868 = smul.addr %s867, 8
        %s869 = scalar_lea.vmem [#allocation5], %s868
        %s870 = sand.u32 %s32, 1
        %s871 = scalar_lea.sflag [#allocation7], %s870
        %s872 = sand.u32 %s285, 1
        %s873 = smul.addr %s872, 8
        %s874 = scalar_lea.vmem [#allocation6], %s873
        %s875 = sand.u32 %s32, 1
        %s876 = scalar_lea.sflag [#allocation7], %s875
        %s877 = sand.u32 %s313, 1
        %s878 = smul.addr %s877, 8
        %s879 = scalar_lea.vmem [#allocation8], %s878
        // Predicated region
        $region61: #{tpu_custom_call.1} parent=55 // pred_check
          %p880 = pneg %p267
        $region62: #{tpu_custom_call.1} parent=55 // pred_check_branch
          %882 = sbr.rel (%p880) target = $region64
        $region63: #{tpu_custom_call.1} parent=55 // pred_region
          %s883 = smul.u32 2, %s37
          %s885 = ssub.s32 128, 128
          %886 = vsyncadd %s866, %s885
          %s887 = smul.addr %s36, 2
          %s888 = sadd.s32 %s883, %s887
          %s889 = smul.addr %s888, 64
          %s890 = scalar_lea.hbm %s9, %s889
          %s892 = sshll.u32 %s869, 4
          %s893 = int_to_ptr.vmem [resolvable:$true] %s892
          %895 = dma.vmem_to_hbm [thread:$0]  %s893, 128, %s890, %s866
        $region64: #{tpu_custom_call.1} parent=55 // pred_fallthru
          _
        // Predicated region
        $region65: #{tpu_custom_call.1} parent=55 // pred_check
          %p896 = pneg %p295
        $region66: #{tpu_custom_call.1} parent=55 // pred_check_branch
          %898 = sbr.rel (%p896) target = $region68
        $region67: #{tpu_custom_call.1} parent=55 // pred_region
          %s899 = smul.u32 2, %s37
          %s901 = ssub.s32 128, 128
          %902 = vsyncadd %s871, %s901
          %s903 = smul.addr %s36, 2
          %s904 = sadd.s32 %s899, %s903
          %s905 = smul.addr %s904, 64
          %s906 = scalar_lea.hbm %s10, %s905
          %s908 = sshll.u32 %s874, 4
          %s909 = int_to_ptr.vmem [resolvable:$true] %s908
          %911 = dma.vmem_to_hbm [thread:$0]  %s909, 128, %s906, %s871
        $region68: #{tpu_custom_call.1} parent=55 // pred_fallthru
          _
        // Predicated region
        $region69: #{tpu_custom_call.1} parent=55 // pred_check
          %p912 = pneg %p323
        $region70: #{tpu_custom_call.1} parent=55 // pred_check_branch
          %914 = sbr.rel (%p912) target = $region72
        $region71: #{tpu_custom_call.1} parent=55 // pred_region
          %s915 = smul.u32 2, %s37
          %s917 = ssub.s32 128, 128
          %918 = vsyncadd %s876, %s917
          %s919 = smul.addr %s36, 2
          %s920 = sadd.s32 %s915, %s919
          %s921 = smul.addr %s920, 64
          %s922 = scalar_lea.hbm %s11, %s921
          %s924 = sshll.u32 %s879, 4
          %s925 = int_to_ptr.vmem [resolvable:$true] %s924
          %927 = dma.vmem_to_hbm [thread:$0]  %s925, 128, %s922, %s876
        $region72: #{tpu_custom_call.1} parent=55 // pred_fallthru
          _
      $region56: #{tpu_custom_call.1} parent=5 // pred_fallthru
        _
      %p928 = scmp.le.s32.totalorder 2, %s27
      // Predicated region
      $region73: #{tpu_custom_call.1} parent=5 // pred_check
        %p929 = pneg %p928
      $region74: #{tpu_custom_call.1} parent=5 // pred_check_branch
        %931 = sbr.rel (%p929) target = $region76
      $region75: #{tpu_custom_call.1} parent=5 // pred_region
        %s932 = ssub.s32 %s27, 2
        // Predicated region
        $region77: #{tpu_custom_call.1} parent=75 // pred_check
          %p933 = pneg %p273
        $region78: #{tpu_custom_call.1} parent=75 // pred_check_branch
          %935 = sbr.rel (%p933) target = $region80
        $region79: #{tpu_custom_call.1} parent=75 // pred_region
          %s936 = sand.u32 %s258, 1
          %s937 = scalar_lea.sflag [#allocation4], %s936
          %s938 = sand.u32 %s258, 1
          %s939 = smul.addr %s938, 8
          %s940 = scalar_lea.vmem [#allocation5], %s939
          %941 = dma.done %s937, 128
        $region80: #{tpu_custom_call.1} parent=75 // pred_fallthru
          _
        // Predicated region
        $region81: #{tpu_custom_call.1} parent=75 // pred_check
          %p942 = pneg %p301
        $region82: #{tpu_custom_call.1} parent=75 // pred_check_branch
          %944 = sbr.rel (%p942) target = $region84
        $region83: #{tpu_custom_call.1} parent=75 // pred_region
          %s945 = sand.u32 %s33, 1
          %s946 = scalar_lea.sflag [#allocation7], %s945
          %s947 = sand.u32 %s286, 1
          %s948 = smul.addr %s947, 8
          %s949 = scalar_lea.vmem [#allocation6], %s948
          %950 = dma.done %s946, 128
        $region84: #{tpu_custom_call.1} parent=75 // pred_fallthru
          _
        // Predicated region
        $region85: #{tpu_custom_call.1} parent=75 // pred_check
          %p951 = pneg %p329
        $region86: #{tpu_custom_call.1} parent=75 // pred_check_branch
          %953 = sbr.rel (%p951) target = $region88
        $region87: #{tpu_custom_call.1} parent=75 // pred_region
          %s954 = sand.u32 %s33, 1
          %s955 = scalar_lea.sflag [#allocation7], %s954
          %s956 = sand.u32 %s314, 1
          %s957 = smul.addr %s956, 8
          %s958 = scalar_lea.vmem [#allocation8], %s957
          %959 = dma.done %s955, 128
        $region88: #{tpu_custom_call.1} parent=75 // pred_fallthru
          _
      $region76: #{tpu_custom_call.1} parent=5 // pred_fallthru
        _
    $region6: #{tpu_custom_call.1} parent=1 // loop_footer
      %s31 = sadd.s32 1, %s27
    $region7: #{tpu_custom_call.1} parent=1 // loop_footer_branch
      %26 = sbr.rel target = $region3
    $region8: #{tpu_custom_call.1} parent=1 // loop_exit
      _
    %960 = vsyncpa [#allocation3], 1
    %s961 = scalar_lea.sflag [#allocation3], 1
    %962 = vsyncpa %s961, 1
    %963 = vsyncpa [#allocation4], 1
    %s964 = scalar_lea.sflag [#allocation4], 1
    %965 = vsyncpa %s964, 1
    %966 = vsyncpa [#allocation7], 1
    %s967 = scalar_lea.sflag [#allocation7], 1
    %968 = vsyncpa %s967, 1

</llo_original>
